<compile_context>
chip_gen: v7x
topology: tpu7x:2x2x1
jax: 0.10.0
libtpu: 0.0.40
codegen_flags: <defaults>
</compile_context>

<pallas_src>
import functools

import jax
import jax.numpy as jnp
from jax.experimental import pallas as pl
from jax.experimental.pallas import tpu as pltpu

GROUPS = 8
EPS = 1e-5


def _round_up(v, m):
    return (v + m - 1) // m * m


# ----------------------------------------------------------------------------
# GroupNorm(8) + SiLU in the (C, L) lane-dense layout, with a validity mask.
# ----------------------------------------------------------------------------
def _gn_silu(acc, mask, gamma, beta, gmat, inv_n):
    # acc  : (C, L) f32 conv output (+bias); garbage at masked-out lanes
    # mask : (1, L) f32, 1.0 at real output pixels
    # gamma, beta : (C, 1);  gmat : (C, C) group-membership (1 if same group)
    am = acc * mask
    mean = jnp.sum(jnp.dot(gmat, am, preferred_element_type=jnp.float32),
                   axis=1, keepdims=True) * inv_n                 # (C, 1)
    d = (acc - mean) * mask
    var = jnp.sum(jnp.dot(gmat, d * d, preferred_element_type=jnp.float32),
                  axis=1, keepdims=True) * inv_n                  # (C, 1)
    y = (acc - mean) * jax.lax.rsqrt(var + EPS) * gamma + beta
    return y * jax.nn.sigmoid(y)                                  # SiLU


# ----------------------------------------------------------------------------
# Fused kernel: conv1 -> GN -> SiLU -> (++cond) -> conv2 -> GN -> SiLU
# One program per batch element.  All spatial indices use "padded-row" flat
# coordinates r = y*(W+2) + x; columns x in {W, W+1} are junk and masked out.
# ----------------------------------------------------------------------------
def _fused_kernel(x_ref, cond_ref, mask_ref, w1_ref, b1_ref, g1_ref, be1_ref,
                  w2_ref, b2_ref, g2_ref, be2_ref, gm_ref,
                  o_ref, x1s_ref, h2_ref, x2s_ref, *, H, W, cout, cond_dim):
    Wp = W + 2
    L = H * Wp                                  # output length (lane dim)
    cin_p = x_ref.shape[1]
    c2p = h2_ref.shape[0]
    inv_n = 1.0 / float(H * W * (cout // GROUPS))
    offs = [dy * Wp + dx for dy in range(3) for dx in range(3)]   # tap offsets

    pad_mask = mask_ref[...]                    # (1, Lin): interior of padded img
    mask_r = mask_ref[:, pl.ds(W + 3, L)]       # (1, L)  : valid output pixels
    gmat = gm_ref[...]

    # ---------- block 1: conv1 as im2col + one K = 9*cin_p matmul -----------
    for k, o in enumerate(offs):
        x1s_ref[pl.ds(k * cin_p, cin_p), :] = x_ref[0, :, pl.ds(o, L)]
    acc1 = jnp.dot(w1_ref[...], x1s_ref[...],
                   preferred_element_type=jnp.float32) + b1_ref[...]
    h1 = _gn_silu(acc1, mask_r, g1_ref[...], be1_ref[...], gmat, inv_n)

    # ---------- build conv2 input [h1 ; cond], zero-padded, in VMEM ---------
    h2_ref[...] = jnp.zeros_like(h2_ref)
    h2_ref[pl.ds(0, cout), pl.ds(W + 3, L)] = h1 * mask_r
    h2_ref[pl.ds(cout, cond_dim), :] = cond_ref[0] * pad_mask

    # ---------- block 2: conv2 as im2col + one K = 9*c2p matmul -------------
    for k, o in enumerate(offs):
        x2s_ref[pl.ds(k * c2p, c2p), :] = h2_ref[:, pl.ds(o, L)]
    acc2 = jnp.dot(w2_ref[...], x2s_ref[...],
                   preferred_element_type=jnp.float32) + b2_ref[...]
    o_ref[0] = _gn_silu(acc2, mask_r, g2_ref[...], be2_ref[...], gmat, inv_n)


# ----------------------------------------------------------------------------
# Wrapper with the PyTorch NCHW boundary (no transposes needed).
# ----------------------------------------------------------------------------
def conditioned_double_conv(x, cond, params):
    """x: (B, Cin, H, W), cond: (B, cond_dim, 1, 1) -> (B, Cout, H, W)."""
    B, Cin, H, W = x.shape
    cond_dim = cond.shape[1]
    Cout = params["w1"].shape[0]
    assert Cout % GROUPS == 0, "GroupNorm(8, C) requires C % 8 == 0"

    Wp, Hp = W + 2, H + 2
    L = H * Wp                       # kernel output lane length
    Lin = Hp * Wp + 2                # padded-flat input length (+2 read guard)
    cin_p = _round_up(Cin, 8)        # pad channels to sublane multiple
    c2 = Cout + cond_dim
    c2p = _round_up(c2, 8)
    f32 = jnp.float32

    # Input: pad channels, 1-pixel spatial zero-pad, flatten spatial, +2 guard.
    xp = jnp.pad(x.astype(f32), ((0, 0), (0, cin_p - Cin), (1, 1), (1, 1)))
    x_flat = jnp.pad(xp.reshape(B, cin_p, Hp * Wp), ((0, 0), (0, 0), (0, 2)))

    cond3 = cond.astype(f32).reshape(B, cond_dim, 1)

    # Interior mask over padded-flat coordinates (1 inside the real image).
    q = jnp.arange(Lin)
    row, col = q // Wp, q % Wp
    pad_mask = ((row >= 1) & (row <= H) & (col >= 1) & (col <= W)
                ).astype(f32)[None, :]                            # (1, Lin)

    # Weights: (Cout, Cin, 3, 3) -> (Cout, 9*Cin_p), columns tap-major.
    def prep_w(w, cp):
        w = jnp.pad(w.astype(f32), ((0, 0), (0, cp - w.shape[1]), (0, 0), (0, 0)))
        return jnp.transpose(w, (0, 2, 3, 1)).reshape(w.shape[0], 9 * cp)

    w1p = prep_w(params["w1"], cin_p)
    w2p = prep_w(params["w2"], c2p)

    col1 = lambda v: v.astype(f32).reshape(Cout, 1)
    b1, g1, be1 = col1(params["b1"]), col1(params["g1"]), col1(params["be1"])
    b2, g2, be2 = col1(params["b2"]), col1(params["g2"]), col1(params["be2"])

    cg = Cout // GROUPS
    gmat = (jnp.arange(Cout)[:, None] // cg ==
            jnp.arange(Cout)[None, :] // cg).astype(f32)          # (Cout, Cout)

    kernel = functools.partial(_fused_kernel, H=H, W=W, cout=Cout,
                               cond_dim=cond_dim)

    # TODO(synk): for large H*W, tile the spatial axis with a 1-row halo so the
    # per-program blocks stay under v7x's 64 MiB VMEM (whole-image blocks here).
    out_r = pl.pallas_call(
        kernel,
        out_shape=jax.ShapeDtypeStruct((B, Cout, L), f32),
        grid=(B,),
        in_specs=[
            pl.BlockSpec((1, cin_p, Lin), lambda b: (b, 0, 0)),     # x (padded, flat)
            pl.BlockSpec((1, cond_dim, 1), lambda b: (b, 0, 0)),    # cond
            pl.BlockSpec((1, Lin), lambda b: (0, 0)),               # interior mask
            pl.BlockSpec((Cout, 9 * cin_p), lambda b: (0, 0)),      # w1
            pl.BlockSpec((Cout, 1), lambda b: (0, 0)),              # b1
            pl.BlockSpec((Cout, 1), lambda b: (0, 0)),              # gamma1
            pl.BlockSpec((Cout, 1), lambda b: (0, 0)),              # beta1
            pl.BlockSpec((Cout, 9 * c2p), lambda b: (0, 0)),        # w2
            pl.BlockSpec((Cout, 1), lambda b: (0, 0)),              # b2
            pl.BlockSpec((Cout, 1), lambda b: (0, 0)),              # gamma2
            pl.BlockSpec((Cout, 1), lambda b: (0, 0)),              # beta2
            pl.BlockSpec((Cout, Cout), lambda b: (0, 0)),           # group matrix
        ],
        out_specs=pl.BlockSpec((1, Cout, L), lambda b: (b, 0, 0)),
        scratch_shapes=[
            pltpu.VMEM((9 * cin_p, L), f32),   # im2col staging, conv1
            pltpu.VMEM((c2p, Lin), f32),       # zero-padded [h1 ; cond]
            pltpu.VMEM((9 * c2p, L), f32),     # im2col staging, conv2
        ],
        compiler_params=pltpu.CompilerParams(
            dimension_semantics=("parallel",)),
    )(x_flat, cond3, pad_mask, w1p, b1, g1, be1, w2p, b2, g2, be2, gmat)

    # (B, Cout, H*(W+2)) -> (B, Cout, H, W): drop the 2 pad columns of each row.
    return out_r.reshape(B, Cout, H, Wp)[:, :, :, :W]


# ----------------------------------------------------------------------------
# Pure-JAX reference (mirrors the PyTorch module) for verification.
# ----------------------------------------------------------------------------
def _reference(x, cond, params):
    def conv2d(x, w, b):
        y = jax.lax.conv_general_dilated(
            x, w, (1, 1), ((1, 1), (1, 1)),
            dimension_numbers=("NCHW", "OIHW", "NCHW"))
        return y + b[None, :, None, None]

    def gn(x, gamma, beta):
        B, C, H, W = x.shape
        xg = x.reshape(B, GROUPS, C // GROUPS, H, W)
        mean = xg.mean(axis=(2, 3, 4), keepdims=True)
        var = xg.var(axis=(2, 3, 4), keepdims=True)
        xn = ((xg - mean) / jnp.sqrt(var + EPS)).reshape(B, C, H, W)
        return xn * gamma[None, :, None, None] + beta[None, :, None, None]

    silu = lambda v: v * jax.nn.sigmoid(v)
    h = silu(gn(conv2d(x, params["w1"], params["b1"]), params["g1"], params["be1"]))
    c = jnp.broadcast_to(cond, (cond.shape[0], cond.shape[1], h.shape[2], h.shape[3]))
    h = jnp.concatenate([h, c], axis=1)
    return silu(gn(conv2d(h, params["w2"], params["b2"]), params["g2"], params["be2"]))


# ----------------------------------------------------------------------------
if __name__ == "__main__":
    # Small shapes consistent with the module: GroupNorm(8, C) requires C % 8 == 0.
    B, Cin, Cout, cond_dim, H, W = 2, 4, 16, 8, 16, 16

    key = jax.random.PRNGKey(0)
    ks = jax.random.split(key, 10)

    params = {
        "w1": jax.random.normal(ks[0], (Cout, Cin, 3, 3), jnp.float32) * 0.2,
        "b1": jax.random.normal(ks[1], (Cout,), jnp.float32) * 0.1,
        "g1": 1.0 + 0.1 * jax.random.normal(ks[2], (Cout,), jnp.float32),
        "be1": 0.1 * jax.random.normal(ks[3], (Cout,), jnp.float32),
        "w2": jax.random.normal(ks[4], (Cout, Cout + cond_dim, 3, 3), jnp.float32) * 0.2,
        "b2": jax.random.normal(ks[5], (Cout,), jnp.float32) * 0.1,
        "g2": 1.0 + 0.1 * jax.random.normal(ks[6], (Cout,), jnp.float32),
        "be2": 0.1 * jax.random.normal(ks[7], (Cout,), jnp.float32),
    }

    x = jax.random.normal(ks[8], (B, Cin, H, W), jnp.float32)
    cond = jax.random.normal(ks[9], (B, cond_dim, 1, 1), jnp.float32)

    out = jax.jit(conditioned_double_conv)(x, cond, params)
    out = jax.block_until_ready(out)

    ref = _reference(x, cond, params)
    assert out.shape == (B, Cout, H, W)
    assert jnp.allclose(out, ref, atol=2e-3, rtol=2e-3), (
        float(jnp.max(jnp.abs(out - ref))))

    print("KERNEL_OK")
</pallas_src>

<mosaic_0001>
module attributes {stable_mosaic.version = 11 : i64} {
  func.func @_fused_kernel(%arg0: i32, %arg1: memref<1x8x326xf32, #tpu.memory_space<vmem>>, %arg2: memref<1x8x1xf32, #tpu.memory_space<vmem>>, %arg3: memref<1x326xf32, #tpu.memory_space<vmem>>, %arg4: memref<16x72xf32, #tpu.memory_space<vmem>>, %arg5: memref<16x1xf32, #tpu.memory_space<vmem>>, %arg6: memref<16x1xf32, #tpu.memory_space<vmem>>, %arg7: memref<16x1xf32, #tpu.memory_space<vmem>>, %arg8: memref<16x216xf32, #tpu.memory_space<vmem>>, %arg9: memref<16x1xf32, #tpu.memory_space<vmem>>, %arg10: memref<16x1xf32, #tpu.memory_space<vmem>>, %arg11: memref<16x1xf32, #tpu.memory_space<vmem>>, %arg12: memref<16x16xf32, #tpu.memory_space<vmem>>, %arg13: memref<1x16x288xf32, #tpu.memory_space<vmem>>, %arg14: memref<72x288xf32, #tpu.memory_space<vmem>>, %arg15: memref<24x326xf32, #tpu.memory_space<vmem>>, %arg16: memref<216x288xf32, #tpu.memory_space<vmem>>) attributes {dimension_semantics = [#tpu.dimension_semantics<parallel>], iteration_bounds = array<i64: 2>, scalar_prefetch = 0 : i64, scratch_operands = 3 : i64, tpu.core_type = #tpu.core_type<tc>, window_params = [{transform_indices = @transform_0, window_bounds = array<i64: 1, 8, 326>}, {transform_indices = @transform_1, window_bounds = array<i64: 1, 8, 1>}, {pipeline_mode = #tpu.pipeline_mode<synchronous>, transform_indices = @transform_2, window_bounds = array<i64: 1, 326>}, {pipeline_mode = #tpu.pipeline_mode<synchronous>, transform_indices = @transform_3, window_bounds = array<i64: 16, 72>}, {pipeline_mode = #tpu.pipeline_mode<synchronous>, transform_indices = @transform_4, window_bounds = array<i64: 16, 1>}, {pipeline_mode = #tpu.pipeline_mode<synchronous>, transform_indices = @transform_5, window_bounds = array<i64: 16, 1>}, {pipeline_mode = #tpu.pipeline_mode<synchronous>, transform_indices = @transform_6, window_bounds = array<i64: 16, 1>}, {pipeline_mode = #tpu.pipeline_mode<synchronous>, transform_indices = @transform_7, window_bounds = array<i64: 16, 216>}, {pipeline_mode = #tpu.pipeline_mode<synchronous>, transform_indices = @transform_8, window_bounds = array<i64: 16, 1>}, {pipeline_mode = #tpu.pipeline_mode<synchronous>, transform_indices = @transform_9, window_bounds = array<i64: 16, 1>}, {pipeline_mode = #tpu.pipeline_mode<synchronous>, transform_indices = @transform_10, window_bounds = array<i64: 16, 1>}, {pipeline_mode = #tpu.pipeline_mode<synchronous>, transform_indices = @transform_11, window_bounds = array<i64: 16, 16>}, {transform_indices = @transform_12, window_bounds = array<i64: 1, 16, 288>}]} {
    %c0 = arith.constant 0 : index
    %c0_0 = arith.constant 0 : index
    %0 = vector.load %arg3[%c0, %c0_0] : memref<1x326xf32, #tpu.memory_space<vmem>>, vector<1x326xf32>
    %c0_1 = arith.constant 0 : index
    %c19 = arith.constant 19 : index
    %1 = vector.load %arg3[%c0_1, %c19] : memref<1x326xf32, #tpu.memory_space<vmem>>, vector<1x288xf32>
    %c0_2 = arith.constant 0 : index
    %c0_3 = arith.constant 0 : index
    %2 = vector.load %arg12[%c0_2, %c0_3] : memref<16x16xf32, #tpu.memory_space<vmem>>, vector<16x16xf32>
    %c0_4 = arith.constant 0 : index
    %c0_5 = arith.constant 0 : index
    %c0_6 = arith.constant 0 : index
    %3 = vector.load %arg1[%c0_4, %c0_5, %c0_6] : memref<1x8x326xf32, #tpu.memory_space<vmem>>, vector<1x8x288xf32>
    %4 = vector.shape_cast %3 : vector<1x8x288xf32> to vector<8x288xf32>
    %c0_7 = arith.constant 0 : index
    %c0_8 = arith.constant 0 : index
    %5 = vector.load %arg14[%c0_7, %c0_8] : memref<72x288xf32, #tpu.memory_space<vmem>>, vector<8x288xf32>
    tpu.vector_store %arg14[%c0_7, %c0_8], %4 {strides = array<i32>} : memref<72x288xf32, #tpu.memory_space<vmem>>, vector<8x288xf32>,
    %c0_9 = arith.constant 0 : index
    %c0_10 = arith.constant 0 : index
    %c1 = arith.constant 1 : index
    %6 = vector.load %arg1[%c0_9, %c0_10, %c1] : memref<1x8x326xf32, #tpu.memory_space<vmem>>, vector<1x8x288xf32>
    %7 = vector.shape_cast %6 : vector<1x8x288xf32> to vector<8x288xf32>
    %c8 = arith.constant 8 : index
    %c0_11 = arith.constant 0 : index
    %8 = vector.load %arg14[%c8, %c0_11] : memref<72x288xf32, #tpu.memory_space<vmem>>, vector<8x288xf32>
    tpu.vector_store %arg14[%c8, %c0_11], %7 {strides = array<i32>} : memref<72x288xf32, #tpu.memory_space<vmem>>, vector<8x288xf32>,
    %c0_12 = arith.constant 0 : index
    %c0_13 = arith.constant 0 : index
    %c2 = arith.constant 2 : index
    %9 = vector.load %arg1[%c0_12, %c0_13, %c2] : memref<1x8x326xf32, #tpu.memory_space<vmem>>, vector<1x8x288xf32>
    %10 = vector.shape_cast %9 : vector<1x8x288xf32> to vector<8x288xf32>
    %c16 = arith.constant 16 : index
    %c0_14 = arith.constant 0 : index
    %11 = vector.load %arg14[%c16, %c0_14] : memref<72x288xf32, #tpu.memory_space<vmem>>, vector<8x288xf32>
    tpu.vector_store %arg14[%c16, %c0_14], %10 {strides = array<i32>} : memref<72x288xf32, #tpu.memory_space<vmem>>, vector<8x288xf32>,
    %c0_15 = arith.constant 0 : index
    %c0_16 = arith.constant 0 : index
    %c18 = arith.constant 18 : index
    %12 = vector.load %arg1[%c0_15, %c0_16, %c18] : memref<1x8x326xf32, #tpu.memory_space<vmem>>, vector<1x8x288xf32>
    %13 = vector.shape_cast %12 : vector<1x8x288xf32> to vector<8x288xf32>
    %c24 = arith.constant 24 : index
    %c0_17 = arith.constant 0 : index
    %14 = vector.load %arg14[%c24, %c0_17] : memref<72x288xf32, #tpu.memory_space<vmem>>, vector<8x288xf32>
    tpu.vector_store %arg14[%c24, %c0_17], %13 {strides = array<i32>} : memref<72x288xf32, #tpu.memory_space<vmem>>, vector<8x288xf32>,
    %c0_18 = arith.constant 0 : index
    %c0_19 = arith.constant 0 : index
    %c19_20 = arith.constant 19 : index
    %15 = vector.load %arg1[%c0_18, %c0_19, %c19_20] : memref<1x8x326xf32, #tpu.memory_space<vmem>>, vector<1x8x288xf32>
    %16 = vector.shape_cast %15 : vector<1x8x288xf32> to vector<8x288xf32>
    %c32 = arith.constant 32 : index
    %c0_21 = arith.constant 0 : index
    %17 = vector.load %arg14[%c32, %c0_21] : memref<72x288xf32, #tpu.memory_space<vmem>>, vector<8x288xf32>
    tpu.vector_store %arg14[%c32, %c0_21], %16 {strides = array<i32>} : memref<72x288xf32, #tpu.memory_space<vmem>>, vector<8x288xf32>,
    %c0_22 = arith.constant 0 : index
    %c0_23 = arith.constant 0 : index
    %c20 = arith.constant 20 : index
    %18 = vector.load %arg1[%c0_22, %c0_23, %c20] : memref<1x8x326xf32, #tpu.memory_space<vmem>>, vector<1x8x288xf32>
    %19 = vector.shape_cast %18 : vector<1x8x288xf32> to vector<8x288xf32>
    %c40 = arith.constant 40 : index
    %c0_24 = arith.constant 0 : index
    %20 = vector.load %arg14[%c40, %c0_24] : memref<72x288xf32, #tpu.memory_space<vmem>>, vector<8x288xf32>
    tpu.vector_store %arg14[%c40, %c0_24], %19 {strides = array<i32>} : memref<72x288xf32, #tpu.memory_space<vmem>>, vector<8x288xf32>,
    %c0_25 = arith.constant 0 : index
    %c0_26 = arith.constant 0 : index
    %c36 = arith.constant 36 : index
    %21 = vector.load %arg1[%c0_25, %c0_26, %c36] : memref<1x8x326xf32, #tpu.memory_space<vmem>>, vector<1x8x288xf32>
    %22 = vector.shape_cast %21 : vector<1x8x288xf32> to vector<8x288xf32>
    %c48 = arith.constant 48 : index
    %c0_27 = arith.constant 0 : index
    %23 = vector.load %arg14[%c48, %c0_27] : memref<72x288xf32, #tpu.memory_space<vmem>>, vector<8x288xf32>
    tpu.vector_store %arg14[%c48, %c0_27], %22 {strides = array<i32>} : memref<72x288xf32, #tpu.memory_space<vmem>>, vector<8x288xf32>,
    %c0_28 = arith.constant 0 : index
    %c0_29 = arith.constant 0 : index
    %c37 = arith.constant 37 : index
    %24 = vector.load %arg1[%c0_28, %c0_29, %c37] : memref<1x8x326xf32, #tpu.memory_space<vmem>>, vector<1x8x288xf32>
    %25 = vector.shape_cast %24 : vector<1x8x288xf32> to vector<8x288xf32>
    %c56 = arith.constant 56 : index
    %c0_30 = arith.constant 0 : index
    %26 = vector.load %arg14[%c56, %c0_30] : memref<72x288xf32, #tpu.memory_space<vmem>>, vector<8x288xf32>
    tpu.vector_store %arg14[%c56, %c0_30], %25 {strides = array<i32>} : memref<72x288xf32, #tpu.memory_space<vmem>>, vector<8x288xf32>,
    %c0_31 = arith.constant 0 : index
    %c0_32 = arith.constant 0 : index
    %c38 = arith.constant 38 : index
    %27 = vector.load %arg1[%c0_31, %c0_32, %c38] : memref<1x8x326xf32, #tpu.memory_space<vmem>>, vector<1x8x288xf32>
    %28 = vector.shape_cast %27 : vector<1x8x288xf32> to vector<8x288xf32>
    %c64 = arith.constant 64 : index
    %c0_33 = arith.constant 0 : index
    %29 = vector.load %arg14[%c64, %c0_33] : memref<72x288xf32, #tpu.memory_space<vmem>>, vector<8x288xf32>
    tpu.vector_store %arg14[%c64, %c0_33], %28 {strides = array<i32>} : memref<72x288xf32, #tpu.memory_space<vmem>>, vector<8x288xf32>,
    %c0_34 = arith.constant 0 : index
    %c0_35 = arith.constant 0 : index
    %30 = vector.load %arg4[%c0_34, %c0_35] : memref<16x72xf32, #tpu.memory_space<vmem>>, vector<16x72xf32>
    %c0_36 = arith.constant 0 : index
    %c0_37 = arith.constant 0 : index
    %31 = vector.load %arg14[%c0_36, %c0_37] : memref<72x288xf32, #tpu.memory_space<vmem>>, vector<72x288xf32>
    %cst = arith.constant dense<0.000000e+00> : vector<16x288xf32>
    %32 = tpu.matmul %30, %31, %cst {dimension_numbers = #tpu.dot_dimension_numbers<[1], [0], [0], [1], [0, 0, 1, 1], [], []>} : vector<16x72xf32>, vector<72x288xf32>, vector<16x288xf32> -> vector<16x288xf32>
    %c0_38 = arith.constant 0 : index
    %c0_39 = arith.constant 0 : index
    %33 = vector.load %arg5[%c0_38, %c0_39] : memref<16x1xf32, #tpu.memory_space<vmem>>, vector<16x1xf32>
    %34 = vector.broadcast %33 : vector<16x1xf32> to vector<16x288xf32>
    %35 = arith.addf %32, %34 : vector<16x288xf32>
    %c0_40 = arith.constant 0 : index
    %c0_41 = arith.constant 0 : index
    %36 = vector.load %arg6[%c0_40, %c0_41] : memref<16x1xf32, #tpu.memory_space<vmem>>, vector<16x1xf32>
    %c0_42 = arith.constant 0 : index
    %c0_43 = arith.constant 0 : index
    %37 = vector.load %arg7[%c0_42, %c0_43] : memref<16x1xf32, #tpu.memory_space<vmem>>, vector<16x1xf32>
    %38 = vector.broadcast %1 : vector<1x288xf32> to vector<16x288xf32>
    %39 = arith.mulf %35, %38 : vector<16x288xf32>
    %cst_44 = arith.constant dense<0.000000e+00> : vector<16x288xf32>
    %40 = tpu.matmul %2, %39, %cst_44 {dimension_numbers = #tpu.dot_dimension_numbers<[1], [0], [0], [1], [0, 0, 1, 1], [], []>} : vector<16x16xf32>, vector<16x288xf32>, vector<16x288xf32> -> vector<16x288xf32>
    %cst_45 = arith.constant dense<0.000000e+00> : vector<16xf32>
    %41 = vector.multi_reduction <add>, %40, %cst_45 [1] : vector<16x288xf32> to vector<16xf32>
    %42 = vector.shape_cast %41 : vector<16xf32> to vector<16x1xf32>
    %cst_46 = arith.constant 0.001953125 : f32
    %43 = vector.broadcast %cst_46 : f32 to vector<16x1xf32>
    %44 = arith.mulf %42, %43 : vector<16x1xf32>
    %45 = vector.broadcast %44 : vector<16x1xf32> to vector<16x288xf32>
    %46 = arith.subf %35, %45 : vector<16x288xf32>
    %47 = vector.broadcast %1 : vector<1x288xf32> to vector<16x288xf32>
    %48 = arith.mulf %46, %47 : vector<16x288xf32>
    %49 = arith.mulf %48, %48 : vector<16x288xf32>
    %cst_47 = arith.constant dense<0.000000e+00> : vector<16x288xf32>
    %50 = tpu.matmul %2, %49, %cst_47 {dimension_numbers = #tpu.dot_dimension_numbers<[1], [0], [0], [1], [0, 0, 1, 1], [], []>} : vector<16x16xf32>, vector<16x288xf32>, vector<16x288xf32> -> vector<16x288xf32>
    %cst_48 = arith.constant dense<0.000000e+00> : vector<16xf32>
    %51 = vector.multi_reduction <add>, %50, %cst_48 [1] : vector<16x288xf32> to vector<16xf32>
    %52 = vector.shape_cast %51 : vector<16xf32> to vector<16x1xf32>
    %cst_49 = arith.constant 0.001953125 : f32
    %53 = vector.broadcast %cst_49 : f32 to vector<16x1xf32>
    %54 = arith.mulf %52, %53 : vector<16x1xf32>
    %55 = vector.broadcast %44 : vector<16x1xf32> to vector<16x288xf32>
    %56 = arith.subf %35, %55 : vector<16x288xf32>
    %cst_50 = arith.constant 9.99999974E-6 : f32
    %57 = vector.broadcast %cst_50 : f32 to vector<16x1xf32>
    %58 = arith.addf %54, %57 : vector<16x1xf32>
    %59 = math.rsqrt %58 : vector<16x1xf32>
    %60 = vector.broadcast %59 : vector<16x1xf32> to vector<16x288xf32>
    %61 = arith.mulf %56, %60 : vector<16x288xf32>
    %62 = vector.broadcast %36 : vector<16x1xf32> to vector<16x288xf32>
    %63 = arith.mulf %61, %62 : vector<16x288xf32>
    %64 = vector.broadcast %37 : vector<16x1xf32> to vector<16x288xf32>
    %65 = arith.addf %63, %64 : vector<16x288xf32>
    %66 = arith.negf %65 : vector<16x288xf32>
    %67 = math.exp %66 : vector<16x288xf32>
    %cst_51 = arith.constant 1.000000e+00 : f32
    %68 = vector.broadcast %cst_51 : f32 to vector<16x288xf32>
    %69 = arith.addf %68, %67 : vector<16x288xf32>
    %70 = arith.divf %68, %69 : vector<16x288xf32>
    %71 = arith.mulf %65, %70 : vector<16x288xf32>
    %cst_52 = arith.constant 0.000000e+00 : f32
    %72 = vector.broadcast %cst_52 : f32 to vector<24x326xf32>
    %c0_53 = arith.constant 0 : index
    %c0_54 = arith.constant 0 : index
    %73 = vector.load %arg15[%c0_53, %c0_54] : memref<24x326xf32, #tpu.memory_space<vmem>>, vector<24x326xf32>
    tpu.vector_store %arg15[%c0_53, %c0_54], %72 {strides = array<i32>} : memref<24x326xf32, #tpu.memory_space<vmem>>, vector<24x326xf32>,
    %74 = vector.broadcast %1 : vector<1x288xf32> to vector<16x288xf32>
    %75 = arith.mulf %71, %74 : vector<16x288xf32>
    %c0_55 = arith.constant 0 : index
    %c19_56 = arith.constant 19 : index
    %76 = vector.load %arg15[%c0_55, %c19_56] : memref<24x326xf32, #tpu.memory_space<vmem>>, vector<16x288xf32>
    tpu.vector_store %arg15[%c0_55, %c19_56], %75 {strides = array<i32>} : memref<24x326xf32, #tpu.memory_space<vmem>>, vector<16x288xf32>,
    %c0_57 = arith.constant 0 : index
    %c0_58 = arith.constant 0 : index
    %c0_59 = arith.constant 0 : index
    %77 = vector.load %arg2[%c0_57, %c0_58, %c0_59] : memref<1x8x1xf32, #tpu.memory_space<vmem>>, vector<1x8x1xf32>
    %78 = vector.shape_cast %77 : vector<1x8x1xf32> to vector<8x1xf32>
    %79 = vector.broadcast %78 : vector<8x1xf32> to vector<8x326xf32>
    %80 = vector.broadcast %0 : vector<1x326xf32> to vector<8x326xf32>
    %81 = arith.mulf %79, %80 : vector<8x326xf32>
    %c16_60 = arith.constant 16 : index
    %c0_61 = arith.constant 0 : index
    %82 = vector.load %arg15[%c16_60, %c0_61] : memref<24x326xf32, #tpu.memory_space<vmem>>, vector<8x326xf32>
    tpu.vector_store %arg15[%c16_60, %c0_61], %81 {strides = array<i32>} : memref<24x326xf32, #tpu.memory_space<vmem>>, vector<8x326xf32>,
    %c0_62 = arith.constant 0 : index
    %c0_63 = arith.constant 0 : index
    %83 = vector.load %arg15[%c0_62, %c0_63] : memref<24x326xf32, #tpu.memory_space<vmem>>, vector<24x288xf32>
    %c0_64 = arith.constant 0 : index
    %c0_65 = arith.constant 0 : index
    %84 = vector.load %arg16[%c0_64, %c0_65] : memref<216x288xf32, #tpu.memory_space<vmem>>, vector<24x288xf32>
    tpu.vector_store %arg16[%c0_64, %c0_65], %83 {strides = array<i32>} : memref<216x288xf32, #tpu.memory_space<vmem>>, vector<24x288xf32>,
    %c0_66 = arith.constant 0 : index
    %c1_67 = arith.constant 1 : index
    %85 = vector.load %arg15[%c0_66, %c1_67] : memref<24x326xf32, #tpu.memory_space<vmem>>, vector<24x288xf32>
    %c24_68 = arith.constant 24 : index
    %c0_69 = arith.constant 0 : index
    %86 = vector.load %arg16[%c24_68, %c0_69] : memref<216x288xf32, #tpu.memory_space<vmem>>, vector<24x288xf32>
    tpu.vector_store %arg16[%c24_68, %c0_69], %85 {strides = array<i32>} : memref<216x288xf32, #tpu.memory_space<vmem>>, vector<24x288xf32>,
    %c0_70 = arith.constant 0 : index
    %c2_71 = arith.constant 2 : index
    %87 = vector.load %arg15[%c0_70, %c2_71] : memref<24x326xf32, #tpu.memory_space<vmem>>, vector<24x288xf32>
    %c48_72 = arith.constant 48 : index
    %c0_73 = arith.constant 0 : index
    %88 = vector.load %arg16[%c48_72, %c0_73] : memref<216x288xf32, #tpu.memory_space<vmem>>, vector<24x288xf32>
    tpu.vector_store %arg16[%c48_72, %c0_73], %87 {strides = array<i32>} : memref<216x288xf32, #tpu.memory_space<vmem>>, vector<24x288xf32>,
    %c0_74 = arith.constant 0 : index
    %c18_75 = arith.constant 18 : index
    %89 = vector.load %arg15[%c0_74, %c18_75] : memref<24x326xf32, #tpu.memory_space<vmem>>, vector<24x288xf32>
    %c72 = arith.constant 72 : index
    %c0_76 = arith.constant 0 : index
    %90 = vector.load %arg16[%c72, %c0_76] : memref<216x288xf32, #tpu.memory_space<vmem>>, vector<24x288xf32>
    tpu.vector_store %arg16[%c72, %c0_76], %89 {strides = array<i32>} : memref<216x288xf32, #tpu.memory_space<vmem>>, vector<24x288xf32>,
    %c0_77 = arith.constant 0 : index
    %c19_78 = arith.constant 19 : index
    %91 = vector.load %arg15[%c0_77, %c19_78] : memref<24x326xf32, #tpu.memory_space<vmem>>, vector<24x288xf32>
    %c96 = arith.constant 96 : index
    %c0_79 = arith.constant 0 : index
    %92 = vector.load %arg16[%c96, %c0_79] : memref<216x288xf32, #tpu.memory_space<vmem>>, vector<24x288xf32>
    tpu.vector_store %arg16[%c96, %c0_79], %91 {strides = array<i32>} : memref<216x288xf32, #tpu.memory_space<vmem>>, vector<24x288xf32>,
    %c0_80 = arith.constant 0 : index
    %c20_81 = arith.constant 20 : index
    %93 = vector.load %arg15[%c0_80, %c20_81] : memref<24x326xf32, #tpu.memory_space<vmem>>, vector<24x288xf32>
    %c120 = arith.constant 120 : index
    %c0_82 = arith.constant 0 : index
    %94 = vector.load %arg16[%c120, %c0_82] : memref<216x288xf32, #tpu.memory_space<vmem>>, vector<24x288xf32>
    tpu.vector_store %arg16[%c120, %c0_82], %93 {strides = array<i32>} : memref<216x288xf32, #tpu.memory_space<vmem>>, vector<24x288xf32>,
    %c0_83 = arith.constant 0 : index
    %c36_84 = arith.constant 36 : index
    %95 = vector.load %arg15[%c0_83, %c36_84] : memref<24x326xf32, #tpu.memory_space<vmem>>, vector<24x288xf32>
    %c144 = arith.constant 144 : index
    %c0_85 = arith.constant 0 : index
    %96 = vector.load %arg16[%c144, %c0_85] : memref<216x288xf32, #tpu.memory_space<vmem>>, vector<24x288xf32>
    tpu.vector_store %arg16[%c144, %c0_85], %95 {strides = array<i32>} : memref<216x288xf32, #tpu.memory_space<vmem>>, vector<24x288xf32>,
    %c0_86 = arith.constant 0 : index
    %c37_87 = arith.constant 37 : index
    %97 = vector.load %arg15[%c0_86, %c37_87] : memref<24x326xf32, #tpu.memory_space<vmem>>, vector<24x288xf32>
    %c168 = arith.constant 168 : index
    %c0_88 = arith.constant 0 : index
    %98 = vector.load %arg16[%c168, %c0_88] : memref<216x288xf32, #tpu.memory_space<vmem>>, vector<24x288xf32>
    tpu.vector_store %arg16[%c168, %c0_88], %97 {strides = array<i32>} : memref<216x288xf32, #tpu.memory_space<vmem>>, vector<24x288xf32>,
    %c0_89 = arith.constant 0 : index
    %c38_90 = arith.constant 38 : index
    %99 = vector.load %arg15[%c0_89, %c38_90] : memref<24x326xf32, #tpu.memory_space<vmem>>, vector<24x288xf32>
    %c192 = arith.constant 192 : index
    %c0_91 = arith.constant 0 : index
    %100 = vector.load %arg16[%c192, %c0_91] : memref<216x288xf32, #tpu.memory_space<vmem>>, vector<24x288xf32>
    tpu.vector_store %arg16[%c192, %c0_91], %99 {strides = array<i32>} : memref<216x288xf32, #tpu.memory_space<vmem>>, vector<24x288xf32>,
    %c0_92 = arith.constant 0 : index
    %c0_93 = arith.constant 0 : index
    %101 = vector.load %arg8[%c0_92, %c0_93] : memref<16x216xf32, #tpu.memory_space<vmem>>, vector<16x216xf32>
    %c0_94 = arith.constant 0 : index
    %c0_95 = arith.constant 0 : index
    %102 = vector.load %arg16[%c0_94, %c0_95] : memref<216x288xf32, #tpu.memory_space<vmem>>, vector<216x288xf32>
    %cst_96 = arith.constant dense<0.000000e+00> : vector<16x288xf32>
    %103 = tpu.matmul %101, %102, %cst_96 {dimension_numbers = #tpu.dot_dimension_numbers<[1], [0], [0], [1], [0, 0, 1, 1], [], []>} : vector<16x216xf32>, vector<216x288xf32>, vector<16x288xf32> -> vector<16x288xf32>
    %c0_97 = arith.constant 0 : index
    %c0_98 = arith.constant 0 : index
    %104 = vector.load %arg9[%c0_97, %c0_98] : memref<16x1xf32, #tpu.memory_space<vmem>>, vector<16x1xf32>
    %105 = vector.broadcast %104 : vector<16x1xf32> to vector<16x288xf32>
    %106 = arith.addf %103, %105 : vector<16x288xf32>
    %c0_99 = arith.constant 0 : index
    %c0_100 = arith.constant 0 : index
    %107 = vector.load %arg10[%c0_99, %c0_100] : memref<16x1xf32, #tpu.memory_space<vmem>>, vector<16x1xf32>
    %c0_101 = arith.constant 0 : index
    %c0_102 = arith.constant 0 : index
    %108 = vector.load %arg11[%c0_101, %c0_102] : memref<16x1xf32, #tpu.memory_space<vmem>>, vector<16x1xf32>
    %109 = vector.broadcast %1 : vector<1x288xf32> to vector<16x288xf32>
    %110 = arith.mulf %106, %109 : vector<16x288xf32>
    %cst_103 = arith.constant dense<0.000000e+00> : vector<16x288xf32>
    %111 = tpu.matmul %2, %110, %cst_103 {dimension_numbers = #tpu.dot_dimension_numbers<[1], [0], [0], [1], [0, 0, 1, 1], [], []>} : vector<16x16xf32>, vector<16x288xf32>, vector<16x288xf32> -> vector<16x288xf32>
    %cst_104 = arith.constant dense<0.000000e+00> : vector<16xf32>
    %112 = vector.multi_reduction <add>, %111, %cst_104 [1] : vector<16x288xf32> to vector<16xf32>
    %113 = vector.shape_cast %112 : vector<16xf32> to vector<16x1xf32>
    %cst_105 = arith.constant 0.001953125 : f32
    %114 = vector.broadcast %cst_105 : f32 to vector<16x1xf32>
    %115 = arith.mulf %113, %114 : vector<16x1xf32>
    %116 = vector.broadcast %115 : vector<16x1xf32> to vector<16x288xf32>
    %117 = arith.subf %106, %116 : vector<16x288xf32>
    %118 = vector.broadcast %1 : vector<1x288xf32> to vector<16x288xf32>
    %119 = arith.mulf %117, %118 : vector<16x288xf32>
    %120 = arith.mulf %119, %119 : vector<16x288xf32>
    %cst_106 = arith.constant dense<0.000000e+00> : vector<16x288xf32>
    %121 = tpu.matmul %2, %120, %cst_106 {dimension_numbers = #tpu.dot_dimension_numbers<[1], [0], [0], [1], [0, 0, 1, 1], [], []>} : vector<16x16xf32>, vector<16x288xf32>, vector<16x288xf32> -> vector<16x288xf32>
    %cst_107 = arith.constant dense<0.000000e+00> : vector<16xf32>
    %122 = vector.multi_reduction <add>, %121, %cst_107 [1] : vector<16x288xf32> to vector<16xf32>
    %123 = vector.shape_cast %122 : vector<16xf32> to vector<16x1xf32>
    %cst_108 = arith.constant 0.001953125 : f32
    %124 = vector.broadcast %cst_108 : f32 to vector<16x1xf32>
    %125 = arith.mulf %123, %124 : vector<16x1xf32>
    %126 = vector.broadcast %115 : vector<16x1xf32> to vector<16x288xf32>
    %127 = arith.subf %106, %126 : vector<16x288xf32>
    %cst_109 = arith.constant 9.99999974E-6 : f32
    %128 = vector.broadcast %cst_109 : f32 to vector<16x1xf32>
    %129 = arith.addf %125, %128 : vector<16x1xf32>
    %130 = math.rsqrt %129 : vector<16x1xf32>
    %131 = vector.broadcast %130 : vector<16x1xf32> to vector<16x288xf32>
    %132 = arith.mulf %127, %131 : vector<16x288xf32>
    %133 = vector.broadcast %107 : vector<16x1xf32> to vector<16x288xf32>
    %134 = arith.mulf %132, %133 : vector<16x288xf32>
    %135 = vector.broadcast %108 : vector<16x1xf32> to vector<16x288xf32>
    %136 = arith.addf %134, %135 : vector<16x288xf32>
    %137 = arith.negf %136 : vector<16x288xf32>
    %138 = math.exp %137 : vector<16x288xf32>
    %cst_110 = arith.constant 1.000000e+00 : f32
    %139 = vector.broadcast %cst_110 : f32 to vector<16x288xf32>
    %140 = arith.addf %139, %138 : vector<16x288xf32>
    %141 = arith.divf %139, %140 : vector<16x288xf32>
    %142 = arith.mulf %136, %141 : vector<16x288xf32>
    %c0_111 = arith.constant 0 : index
    %c0_112 = arith.constant 0 : index
    %c0_113 = arith.constant 0 : index
    %143 = vector.load %arg13[%c0_111, %c0_112, %c0_113] : memref<1x16x288xf32, #tpu.memory_space<vmem>>, vector<1x16x288xf32>
    %144 = vector.shape_cast %143 : vector<1x16x288xf32> to vector<16x288xf32>
    %145 = vector.shape_cast %142 : vector<16x288xf32> to vector<1x16x288xf32>
    tpu.vector_store %arg13[%c0_111, %c0_112, %c0_113], %145 {strides = array<i32>} : memref<1x16x288xf32, #tpu.memory_space<vmem>>, vector<1x16x288xf32>,
    return
  }
  func.func @transform_0(%arg0: i32) -> (i32, i32, i32) {
    %c0_i32 = arith.constant 0 : i32
    %c0_i32_0 = arith.constant 0 : i32
    %c0_i32_1 = arith.constant 0 : i32
    return %arg0, %c0_i32, %c0_i32_0 : i32, i32, i32
  }
  func.func @transform_1(%arg0: i32) -> (i32, i32, i32) {
    %c0_i32 = arith.constant 0 : i32
    %c0_i32_0 = arith.constant 0 : i32
    %c0_i32_1 = arith.constant 0 : i32
    return %arg0, %c0_i32, %c0_i32_0 : i32, i32, i32
  }
  func.func @transform_2(%arg0: i32) -> (i32, i32) {
    %c0_i32 = arith.constant 0 : i32
    %c0_i32_0 = arith.constant 0 : i32
    %c0_i32_1 = arith.constant 0 : i32
    return %c0_i32, %c0_i32_0 : i32, i32
  }
  func.func @transform_3(%arg0: i32) -> (i32, i32) {
    %c0_i32 = arith.constant 0 : i32
    %c0_i32_0 = arith.constant 0 : i32
    %c0_i32_1 = arith.constant 0 : i32
    return %c0_i32, %c0_i32_0 : i32, i32
  }
  func.func @transform_4(%arg0: i32) -> (i32, i32) {
    %c0_i32 = arith.constant 0 : i32
    %c0_i32_0 = arith.constant 0 : i32
    %c0_i32_1 = arith.constant 0 : i32
    return %c0_i32, %c0_i32_0 : i32, i32
  }
  func.func @transform_5(%arg0: i32) -> (i32, i32) {
    %c0_i32 = arith.constant 0 : i32
    %c0_i32_0 = arith.constant 0 : i32
    %c0_i32_1 = arith.constant 0 : i32
    return %c0_i32, %c0_i32_0 : i32, i32
  }
  func.func @transform_6(%arg0: i32) -> (i32, i32) {
    %c0_i32 = arith.constant 0 : i32
    %c0_i32_0 = arith.constant 0 : i32
    %c0_i32_1 = arith.constant 0 : i32
    return %c0_i32, %c0_i32_0 : i32, i32
  }
  func.func @transform_7(%arg0: i32) -> (i32, i32) {
    %c0_i32 = arith.constant 0 : i32
    %c0_i32_0 = arith.constant 0 : i32
    %c0_i32_1 = arith.constant 0 : i32
    return %c0_i32, %c0_i32_0 : i32, i32
  }
  func.func @transform_8(%arg0: i32) -> (i32, i32) {
    %c0_i32 = arith.constant 0 : i32
    %c0_i32_0 = arith.constant 0 : i32
    %c0_i32_1 = arith.constant 0 : i32
    return %c0_i32, %c0_i32_0 : i32, i32
  }
  func.func @transform_9(%arg0: i32) -> (i32, i32) {
    %c0_i32 = arith.constant 0 : i32
    %c0_i32_0 = arith.constant 0 : i32
    %c0_i32_1 = arith.constant 0 : i32
    return %c0_i32, %c0_i32_0 : i32, i32
  }
  func.func @transform_10(%arg0: i32) -> (i32, i32) {
    %c0_i32 = arith.constant 0 : i32
    %c0_i32_0 = arith.constant 0 : i32
    %c0_i32_1 = arith.constant 0 : i32
    return %c0_i32, %c0_i32_0 : i32, i32
  }
  func.func @transform_11(%arg0: i32) -> (i32, i32) {
    %c0_i32 = arith.constant 0 : i32
    %c0_i32_0 = arith.constant 0 : i32
    %c0_i32_1 = arith.constant 0 : i32
    return %c0_i32, %c0_i32_0 : i32, i32
  }
  func.func @transform_12(%arg0: i32) -> (i32, i32, i32) {
    %c0_i32 = arith.constant 0 : i32
    %c0_i32_0 = arith.constant 0 : i32
    %c0_i32_1 = arith.constant 0 : i32
    return %arg0, %c0_i32, %c0_i32_0 : i32, i32, i32
  }
}

</mosaic_0001>

<llo_original>
// kernel: conditioned_double_conv.1
$region0: #{conditioned_double_conv.1}
  #allocation0 [shape = 'u32[]', space=smem, size = 0x4, offset = 0x4, fixed_abs, tag = 'smem constant byte address 0x4 - core index']
  #allocation1 [shape = 'u32[144,128]{1,0:T(1,128)}', space=vmem, size = 0x12000, scoped, tag = 'internal scratch']
  #allocation2 [shape = 'f32[72,288]{1,0:T(8,128)}', space=vmem, size = 0x1b000, scoped, tag = 'scratch operand']
  #allocation3 [shape = 'f32[24,326]{1,0:T(8,128)}', space=vmem, size = 0x9000, scoped, tag = 'scratch operand']
  #allocation4 [shape = 'f32[216,288]{1,0:T(8,128)}', space=vmem, size = 0x51000, scoped, tag = 'scratch operand']
  %s0 = inlined_call_operand.vmem [shape: f32[2,8,326], index: 0, kind: input, shape index: {}]
  %s1 = inlined_call_operand.vmem [shape: f32[2,8,1], index: 1, kind: input, shape index: {}]
  %s2 = inlined_call_operand.vmem [shape: f32[1,326], index: 2, kind: input, shape index: {}]
  %s3 = inlined_call_operand.vmem [shape: f32[16,72], index: 3, kind: input, shape index: {}]
  %s4 = inlined_call_operand.vmem [shape: f32[16,1], index: 4, kind: input, shape index: {}]
  %s5 = inlined_call_operand.vmem [shape: f32[16,1], index: 5, kind: input, shape index: {}]
  %s6 = inlined_call_operand.vmem [shape: f32[16,1], index: 6, kind: input, shape index: {}]
  %s7 = inlined_call_operand.vmem [shape: f32[16,216], index: 7, kind: input, shape index: {}]
  %s8 = inlined_call_operand.vmem [shape: f32[16,1], index: 8, kind: input, shape index: {}]
  %s9 = inlined_call_operand.vmem [shape: f32[16,1], index: 9, kind: input, shape index: {}]
  %s10 = inlined_call_operand.vmem [shape: f32[16,1], index: 10, kind: input, shape index: {}]
  %s11 = inlined_call_operand.vmem [shape: f32[16,16], index: 11, kind: input, shape index: {}]
  %s12 = inlined_call_operand.vmem [shape: f32[2,16,288], index: 12, kind: output, shape index: {}]
  %s13 = sld [smem:[#allocation0]]
  $region81: #{conditioned_double_conv.1} parent=0
    _
  %s15 = ssub.s32 1, %s13
  %s16 = scalar_select 0, %s15, %s13
  loop: start=0, step=1, limit=4
  $region2: #{conditioned_double_conv.1} parent=0 // loop_pre_header
    _
  $region3: #{conditioned_double_conv.1} parent=0 // loop_header
    %s18 = sphi 0, %s22
    %p19 = scmp.ge.s32.totalorder %s18, 4
    %s28 = sphi 0, %s30
    %s31 = sphi 0, %s28
    %s32 = sphi 0, %s31
    %s48 = sphi 0, %s32
    %s54 = sphi 0, %s56
    %s57 = sphi 0, %s54
    %s58 = sphi 0, %s57
    %s74 = sphi 0, %s58
    %s78 = sphi 0, %s78
    %s80 = sphi 0, %s78
    %s81 = sphi 0, %s80
    %s95 = sphi 0, %s81
    %s99 = sphi 0, %s99
    %s101 = sphi 0, %s99
    %s102 = sphi 0, %s101
    %s116 = sphi 0, %s102
    %s120 = sphi 0, %s120
    %s122 = sphi 0, %s120
    %s123 = sphi 0, %s122
    %s137 = sphi 0, %s123
    %s141 = sphi 0, %s141
    %s143 = sphi 0, %s141
    %s144 = sphi 0, %s143
    %s158 = sphi 0, %s144
    %s162 = sphi 0, %s162
    %s164 = sphi 0, %s162
    %s165 = sphi 0, %s164
    %s179 = sphi 0, %s165
    %s183 = sphi 0, %s183
    %s185 = sphi 0, %s183
    %s186 = sphi 0, %s185
    %s200 = sphi 0, %s186
    %s204 = sphi 0, %s204
    %s206 = sphi 0, %s204
    %s207 = sphi 0, %s206
    %s221 = sphi 0, %s207
    %s225 = sphi 0, %s225
    %s227 = sphi 0, %s225
    %s228 = sphi 0, %s227
    %s242 = sphi 0, %s228
    %s246 = sphi 0, %s246
    %s248 = sphi 0, %s246
    %s249 = sphi 0, %s248
    %s263 = sphi 0, %s249
    %s267 = sphi 0, %s267
    %s269 = sphi 0, %s267
    %s270 = sphi 0, %s269
    %s284 = sphi 0, %s270
    %s290 = sphi 0, %s292
    %s293 = sphi 0, %s290
    %s294 = sphi 0, %s293
    %s310 = sphi 0, %s294
  $region4: #{conditioned_double_conv.1} parent=0 // loop_header_branch
    %21 = sbr.rel (%p19) target = $region8
  $region5: #{conditioned_double_conv.1} parent=0 // loop_body
    %s23 = ssub.s32 %s18, 1
    %s24 = ssub.s32 %s18, 2
    %s25 = sadd.s32 %s18, 1
    %s26 = ssub.s32 %s18, %s25
    %p27 = scmp.eq.s32.totalorder %s26, 0
    %s29 = sadd.s32 %s28, 1
    %s30 = scalar_select %p27, %s28, %s29
    %p33 = pneg %p27
    %p34 = scmp.eq.s32.totalorder %s18, 1
    %p35 = por %p33, %p34
    %p36 = scmp.ne.s32.totalorder %s28, %s31
    %p37 = scmp.eq.s32.totalorder %s18, 0
    %p38 = por %p36, %p37
    %p39 = scmp.ne.s32.totalorder %s28, %s31
    %p40 = scmp.eq.s32.totalorder %s23, 1
    %p41 = por %p39, %p40
    %p42 = scmp.ne.s32.totalorder %s31, %s32
    %p43 = scmp.eq.s32.totalorder %s23, 0
    %p44 = por %p42, %p43
    %p45 = scmp.ne.s32.totalorder %s31, %s32
    %p46 = scmp.eq.s32.totalorder %s24, 1
    %p47 = por %p45, %p46
    %p49 = scmp.ne.s32.totalorder %s32, %s48
    %p50 = scmp.eq.s32.totalorder %s24, 0
    %p51 = por %p49, %p50
    %s52 = ssub.s32 %s18, %s25
    %p53 = scmp.eq.s32.totalorder %s52, 0
    %s55 = sadd.s32 %s54, 1
    %s56 = scalar_select %p53, %s54, %s55
    %p59 = pneg %p53
    %p60 = scmp.eq.s32.totalorder %s18, 1
    %p61 = por %p59, %p60
    %p62 = scmp.ne.s32.totalorder %s54, %s57
    %p63 = scmp.eq.s32.totalorder %s18, 0
    %p64 = por %p62, %p63
    %p65 = scmp.ne.s32.totalorder %s54, %s57
    %p66 = scmp.eq.s32.totalorder %s23, 1
    %p67 = por %p65, %p66
    %p68 = scmp.ne.s32.totalorder %s57, %s58
    %p69 = scmp.eq.s32.totalorder %s23, 0
    %p70 = por %p68, %p69
    %p71 = scmp.ne.s32.totalorder %s57, %s58
    %p72 = scmp.eq.s32.totalorder %s24, 1
    %p73 = por %p71, %p72
    %p75 = scmp.ne.s32.totalorder %s58, %s74
    %p76 = scmp.eq.s32.totalorder %s24, 0
    %p77 = por %p75, %p76
    %s79 = sadd.s32 %s78, 1
    %p82 = scmp.eq.s32.totalorder %s18, 1
    %p83 = scmp.ne.s32.totalorder %s78, %s80
    %p84 = scmp.eq.s32.totalorder %s18, 0
    %p85 = por %p83, %p84
    %p86 = scmp.ne.s32.totalorder %s78, %s80
    %p87 = scmp.eq.s32.totalorder %s23, 1
    %p88 = por %p86, %p87
    %p89 = scmp.ne.s32.totalorder %s80, %s81
    %p90 = scmp.eq.s32.totalorder %s23, 0
    %p91 = por %p89, %p90
    %p92 = scmp.ne.s32.totalorder %s80, %s81
    %p93 = scmp.eq.s32.totalorder %s24, 1
    %p94 = por %p92, %p93
    %p96 = scmp.ne.s32.totalorder %s81, %s95
    %p97 = scmp.eq.s32.totalorder %s24, 0
    %p98 = por %p96, %p97
    %s100 = sadd.s32 %s99, 1
    %p103 = scmp.eq.s32.totalorder %s18, 1
    %p104 = scmp.ne.s32.totalorder %s99, %s101
    %p105 = scmp.eq.s32.totalorder %s18, 0
    %p106 = por %p104, %p105
    %p107 = scmp.ne.s32.totalorder %s99, %s101
    %p108 = scmp.eq.s32.totalorder %s23, 1
    %p109 = por %p107, %p108
    %p110 = scmp.ne.s32.totalorder %s101, %s102
    %p111 = scmp.eq.s32.totalorder %s23, 0
    %p112 = por %p110, %p111
    %p113 = scmp.ne.s32.totalorder %s101, %s102
    %p114 = scmp.eq.s32.totalorder %s24, 1
    %p115 = por %p113, %p114
    %p117 = scmp.ne.s32.totalorder %s102, %s116
    %p118 = scmp.eq.s32.totalorder %s24, 0
    %p119 = por %p117, %p118
    %s121 = sadd.s32 %s120, 1
    %p124 = scmp.eq.s32.totalorder %s18, 1
    %p125 = scmp.ne.s32.totalorder %s120, %s122
    %p126 = scmp.eq.s32.totalorder %s18, 0
    %p127 = por %p125, %p126
    %p128 = scmp.ne.s32.totalorder %s120, %s122
    %p129 = scmp.eq.s32.totalorder %s23, 1
    %p130 = por %p128, %p129
    %p131 = scmp.ne.s32.totalorder %s122, %s123
    %p132 = scmp.eq.s32.totalorder %s23, 0
    %p133 = por %p131, %p132
    %p134 = scmp.ne.s32.totalorder %s122, %s123
    %p135 = scmp.eq.s32.totalorder %s24, 1
    %p136 = por %p134, %p135
    %p138 = scmp.ne.s32.totalorder %s123, %s137
    %p139 = scmp.eq.s32.totalorder %s24, 0
    %p140 = por %p138, %p139
    %s142 = sadd.s32 %s141, 1
    %p145 = scmp.eq.s32.totalorder %s18, 1
    %p146 = scmp.ne.s32.totalorder %s141, %s143
    %p147 = scmp.eq.s32.totalorder %s18, 0
    %p148 = por %p146, %p147
    %p149 = scmp.ne.s32.totalorder %s141, %s143
    %p150 = scmp.eq.s32.totalorder %s23, 1
    %p151 = por %p149, %p150
    %p152 = scmp.ne.s32.totalorder %s143, %s144
    %p153 = scmp.eq.s32.totalorder %s23, 0
    %p154 = por %p152, %p153
    %p155 = scmp.ne.s32.totalorder %s143, %s144
    %p156 = scmp.eq.s32.totalorder %s24, 1
    %p157 = por %p155, %p156
    %p159 = scmp.ne.s32.totalorder %s144, %s158
    %p160 = scmp.eq.s32.totalorder %s24, 0
    %p161 = por %p159, %p160
    %s163 = sadd.s32 %s162, 1
    %p166 = scmp.eq.s32.totalorder %s18, 1
    %p167 = scmp.ne.s32.totalorder %s162, %s164
    %p168 = scmp.eq.s32.totalorder %s18, 0
    %p169 = por %p167, %p168
    %p170 = scmp.ne.s32.totalorder %s162, %s164
    %p171 = scmp.eq.s32.totalorder %s23, 1
    %p172 = por %p170, %p171
    %p173 = scmp.ne.s32.totalorder %s164, %s165
    %p174 = scmp.eq.s32.totalorder %s23, 0
    %p175 = por %p173, %p174
    %p176 = scmp.ne.s32.totalorder %s164, %s165
    %p177 = scmp.eq.s32.totalorder %s24, 1
    %p178 = por %p176, %p177
    %p180 = scmp.ne.s32.totalorder %s165, %s179
    %p181 = scmp.eq.s32.totalorder %s24, 0
    %p182 = por %p180, %p181
    %s184 = sadd.s32 %s183, 1
    %p187 = scmp.eq.s32.totalorder %s18, 1
    %p188 = scmp.ne.s32.totalorder %s183, %s185
    %p189 = scmp.eq.s32.totalorder %s18, 0
    %p190 = por %p188, %p189
    %p191 = scmp.ne.s32.totalorder %s183, %s185
    %p192 = scmp.eq.s32.totalorder %s23, 1
    %p193 = por %p191, %p192
    %p194 = scmp.ne.s32.totalorder %s185, %s186
    %p195 = scmp.eq.s32.totalorder %s23, 0
    %p196 = por %p194, %p195
    %p197 = scmp.ne.s32.totalorder %s185, %s186
    %p198 = scmp.eq.s32.totalorder %s24, 1
    %p199 = por %p197, %p198
    %p201 = scmp.ne.s32.totalorder %s186, %s200
    %p202 = scmp.eq.s32.totalorder %s24, 0
    %p203 = por %p201, %p202
    %s205 = sadd.s32 %s204, 1
    %p208 = scmp.eq.s32.totalorder %s18, 1
    %p209 = scmp.ne.s32.totalorder %s204, %s206
    %p210 = scmp.eq.s32.totalorder %s18, 0
    %p211 = por %p209, %p210
    %p212 = scmp.ne.s32.totalorder %s204, %s206
    %p213 = scmp.eq.s32.totalorder %s23, 1
    %p214 = por %p212, %p213
    %p215 = scmp.ne.s32.totalorder %s206, %s207
    %p216 = scmp.eq.s32.totalorder %s23, 0
    %p217 = por %p215, %p216
    %p218 = scmp.ne.s32.totalorder %s206, %s207
    %p219 = scmp.eq.s32.totalorder %s24, 1
    %p220 = por %p218, %p219
    %p222 = scmp.ne.s32.totalorder %s207, %s221
    %p223 = scmp.eq.s32.totalorder %s24, 0
    %p224 = por %p222, %p223
    %s226 = sadd.s32 %s225, 1
    %p229 = scmp.eq.s32.totalorder %s18, 1
    %p230 = scmp.ne.s32.totalorder %s225, %s227
    %p231 = scmp.eq.s32.totalorder %s18, 0
    %p232 = por %p230, %p231
    %p233 = scmp.ne.s32.totalorder %s225, %s227
    %p234 = scmp.eq.s32.totalorder %s23, 1
    %p235 = por %p233, %p234
    %p236 = scmp.ne.s32.totalorder %s227, %s228
    %p237 = scmp.eq.s32.totalorder %s23, 0
    %p238 = por %p236, %p237
    %p239 = scmp.ne.s32.totalorder %s227, %s228
    %p240 = scmp.eq.s32.totalorder %s24, 1
    %p241 = por %p239, %p240
    %p243 = scmp.ne.s32.totalorder %s228, %s242
    %p244 = scmp.eq.s32.totalorder %s24, 0
    %p245 = por %p243, %p244
    %s247 = sadd.s32 %s246, 1
    %p250 = scmp.eq.s32.totalorder %s18, 1
    %p251 = scmp.ne.s32.totalorder %s246, %s248
    %p252 = scmp.eq.s32.totalorder %s18, 0
    %p253 = por %p251, %p252
    %p254 = scmp.ne.s32.totalorder %s246, %s248
    %p255 = scmp.eq.s32.totalorder %s23, 1
    %p256 = por %p254, %p255
    %p257 = scmp.ne.s32.totalorder %s248, %s249
    %p258 = scmp.eq.s32.totalorder %s23, 0
    %p259 = por %p257, %p258
    %p260 = scmp.ne.s32.totalorder %s248, %s249
    %p261 = scmp.eq.s32.totalorder %s24, 1
    %p262 = por %p260, %p261
    %p264 = scmp.ne.s32.totalorder %s249, %s263
    %p265 = scmp.eq.s32.totalorder %s24, 0
    %p266 = por %p264, %p265
    %s268 = sadd.s32 %s267, 1
    %p271 = scmp.eq.s32.totalorder %s18, 1
    %p272 = scmp.ne.s32.totalorder %s267, %s269
    %p273 = scmp.eq.s32.totalorder %s18, 0
    %p274 = por %p272, %p273
    %p275 = scmp.ne.s32.totalorder %s267, %s269
    %p276 = scmp.eq.s32.totalorder %s23, 1
    %p277 = por %p275, %p276
    %p278 = scmp.ne.s32.totalorder %s269, %s270
    %p279 = scmp.eq.s32.totalorder %s23, 0
    %p280 = por %p278, %p279
    %p281 = scmp.ne.s32.totalorder %s269, %s270
    %p282 = scmp.eq.s32.totalorder %s24, 1
    %p283 = por %p281, %p282
    %p285 = scmp.ne.s32.totalorder %s270, %s284
    %p286 = scmp.eq.s32.totalorder %s24, 0
    %p287 = por %p285, %p286
    %s288 = ssub.s32 %s18, %s25
    %p289 = scmp.eq.s32.totalorder %s288, 0
    %s291 = sadd.s32 %s290, 1
    %s292 = scalar_select %p289, %s290, %s291
    %p295 = pneg %p289
    %p296 = scmp.eq.s32.totalorder %s18, 1
    %p297 = por %p295, %p296
    %p298 = scmp.ne.s32.totalorder %s290, %s293
    %p299 = scmp.eq.s32.totalorder %s18, 0
    %p300 = por %p298, %p299
    %p301 = scmp.ne.s32.totalorder %s290, %s293
    %p302 = scmp.eq.s32.totalorder %s23, 1
    %p303 = por %p301, %p302
    %p304 = scmp.ne.s32.totalorder %s293, %s294
    %p305 = scmp.eq.s32.totalorder %s23, 0
    %p306 = por %p304, %p305
    %p307 = scmp.ne.s32.totalorder %s293, %s294
    %p308 = scmp.eq.s32.totalorder %s24, 1
    %p309 = por %p307, %p308
    %p311 = scmp.ne.s32.totalorder %s294, %s310
    %p312 = scmp.eq.s32.totalorder %s24, 0
    %p313 = por %p311, %p312
    %p314 = scmp.le.s32.totalorder 1, %s18
    %p315 = scmp.lt.s32.totalorder %s18, 3
    %p316 = pnand %p314, %p315
    %p317 = pneg %p316
    // Predicated region
    $region9: #{conditioned_double_conv.1} parent=5 // pred_check
      _
    $region10: #{conditioned_double_conv.1} parent=5 // pred_check_branch
      %319 = sbr.rel (%p316) target = $region12
    $region11: #{conditioned_double_conv.1} parent=5 // pred_region
      %s320 = ssub.s32 %s18, 1
      // Predicated region
      $region13: #{conditioned_double_conv.1} parent=11 // pred_check
        %p321 = pneg %p91
      $region14: #{conditioned_double_conv.1} parent=11 // pred_check_branch
        %323 = sbr.rel (%p321) target = $region16
      $region15: #{conditioned_double_conv.1} parent=11 // pred_region
        _
      $region16: #{conditioned_double_conv.1} parent=11 // pred_fallthru
        _
      // Predicated region
      $region17: #{conditioned_double_conv.1} parent=11 // pred_check
        %p324 = pneg %p112
      $region18: #{conditioned_double_conv.1} parent=11 // pred_check_branch
        %326 = sbr.rel (%p324) target = $region20
      $region19: #{conditioned_double_conv.1} parent=11 // pred_region
        _
      $region20: #{conditioned_double_conv.1} parent=11 // pred_fallthru
        _
      // Predicated region
      $region21: #{conditioned_double_conv.1} parent=11 // pred_check
        %p327 = pneg %p133
      $region22: #{conditioned_double_conv.1} parent=11 // pred_check_branch
        %329 = sbr.rel (%p327) target = $region24
      $region23: #{conditioned_double_conv.1} parent=11 // pred_region
        _
      $region24: #{conditioned_double_conv.1} parent=11 // pred_fallthru
        _
      // Predicated region
      $region25: #{conditioned_double_conv.1} parent=11 // pred_check
        %p330 = pneg %p154
      $region26: #{conditioned_double_conv.1} parent=11 // pred_check_branch
        %332 = sbr.rel (%p330) target = $region28
      $region27: #{conditioned_double_conv.1} parent=11 // pred_region
        _
      $region28: #{conditioned_double_conv.1} parent=11 // pred_fallthru
        _
      // Predicated region
      $region29: #{conditioned_double_conv.1} parent=11 // pred_check
        %p333 = pneg %p175
      $region30: #{conditioned_double_conv.1} parent=11 // pred_check_branch
        %335 = sbr.rel (%p333) target = $region32
      $region31: #{conditioned_double_conv.1} parent=11 // pred_region
        _
      $region32: #{conditioned_double_conv.1} parent=11 // pred_fallthru
        _
      // Predicated region
      $region33: #{conditioned_double_conv.1} parent=11 // pred_check
        %p336 = pneg %p196
      $region34: #{conditioned_double_conv.1} parent=11 // pred_check_branch
        %338 = sbr.rel (%p336) target = $region36
      $region35: #{conditioned_double_conv.1} parent=11 // pred_region
        _
      $region36: #{conditioned_double_conv.1} parent=11 // pred_fallthru
        _
      // Predicated region
      $region37: #{conditioned_double_conv.1} parent=11 // pred_check
        %p339 = pneg %p217
      $region38: #{conditioned_double_conv.1} parent=11 // pred_check_branch
        %341 = sbr.rel (%p339) target = $region40
      $region39: #{conditioned_double_conv.1} parent=11 // pred_region
        _
      $region40: #{conditioned_double_conv.1} parent=11 // pred_fallthru
        _
      // Predicated region
      $region41: #{conditioned_double_conv.1} parent=11 // pred_check
        %p342 = pneg %p238
      $region42: #{conditioned_double_conv.1} parent=11 // pred_check_branch
        %344 = sbr.rel (%p342) target = $region44
      $region43: #{conditioned_double_conv.1} parent=11 // pred_region
        _
      $region44: #{conditioned_double_conv.1} parent=11 // pred_fallthru
        _
      // Predicated region
      $region45: #{conditioned_double_conv.1} parent=11 // pred_check
        %p345 = pneg %p259
      $region46: #{conditioned_double_conv.1} parent=11 // pred_check_branch
        %347 = sbr.rel (%p345) target = $region48
      $region47: #{conditioned_double_conv.1} parent=11 // pred_region
        _
      $region48: #{conditioned_double_conv.1} parent=11 // pred_fallthru
        _
      // Predicated region
      $region49: #{conditioned_double_conv.1} parent=11 // pred_check
        %p348 = pneg %p280
      $region50: #{conditioned_double_conv.1} parent=11 // pred_check_branch
        %350 = sbr.rel (%p348) target = $region52
      $region51: #{conditioned_double_conv.1} parent=11 // pred_region
        _
      $region52: #{conditioned_double_conv.1} parent=11 // pred_fallthru
        _
    $region12: #{conditioned_double_conv.1} parent=5 // pred_fallthru
      _
    %p351 = scmp.lt.s32.totalorder %s18, 2
    // Predicated region
    $region53: #{conditioned_double_conv.1} parent=5 // pred_check
      %p352 = pneg %p351
    $region54: #{conditioned_double_conv.1} parent=5 // pred_check_branch
      %354 = sbr.rel (%p352) target = $region56
    $region55: #{conditioned_double_conv.1} parent=5 // pred_region
      // Predicated region
      $region57: #{conditioned_double_conv.1} parent=55 // pred_check
        %p355 = pneg %p38
      $region58: #{conditioned_double_conv.1} parent=55 // pred_check_branch
        %357 = sbr.rel (%p355) target = $region60
      $region59: #{conditioned_double_conv.1} parent=55 // pred_region
        %p358 = scmp.lt.s32.totalorder %s18, 1
        %s359 = scalar_select %p358, %s18, 1
        %s360 = smul.addr %s359, 3
        %s361 = smul.addr %s360, 8
        %s362 = scalar_lea.vmem %s0, %s361
      $region60: #{conditioned_double_conv.1} parent=55 // pred_fallthru
        _
      // Predicated region
      $region61: #{conditioned_double_conv.1} parent=55 // pred_check
        %p363 = pneg %p64
      $region62: #{conditioned_double_conv.1} parent=55 // pred_check_branch
        %365 = sbr.rel (%p363) target = $region64
      $region63: #{conditioned_double_conv.1} parent=55 // pred_region
        %p366 = scmp.lt.s32.totalorder %s18, 1
        %s367 = scalar_select %p366, %s18, 1
        %s368 = smul.addr %s367, 8
        %s369 = scalar_lea.vmem %s1, %s368
      $region64: #{conditioned_double_conv.1} parent=55 // pred_fallthru
        _
    $region56: #{conditioned_double_conv.1} parent=5 // pred_fallthru
      _
    %p370 = scmp.le.s32.totalorder 1, %s18
    %p371 = scmp.lt.s32.totalorder %s18, 3
    %p372 = pnand %p370, %p371
    %p373 = pneg %p372
    // Predicated region
    $region65: #{conditioned_double_conv.1} parent=5 // pred_check
      _
    $region66: #{conditioned_double_conv.1} parent=5 // pred_check_branch
      %375 = sbr.rel (%p372) target = $region68
    $region67: #{conditioned_double_conv.1} parent=5 // pred_region
      %s376 = ssub.s32 %s18, 1
      %p377 = scmp.lt.s32.totalorder %s23, 1
      %s378 = scalar_select %p377, %s23, 1
      %s379 = smul.addr %s378, 3
      %s380 = smul.addr %s379, 8
      %s381 = scalar_lea.vmem %s0, %s380
      %p382 = pneg %p44
      %p383 = pneg %p41
      %p384 = scmp.lt.s32.totalorder %s23, 1
      %s385 = scalar_select %p384, %s23, 1
      %s386 = smul.addr %s385, 8
      %s387 = scalar_lea.vmem %s1, %s386
      %p388 = pneg %p70
      %p389 = pneg %p67
      %p390 = pneg %p91
      %p391 = pneg %p88
      %p392 = pneg %p112
      %p393 = pneg %p109
      %p394 = pneg %p133
      %p395 = pneg %p130
      %p396 = pneg %p154
      %p397 = pneg %p151
      %p398 = pneg %p175
      %p399 = pneg %p172
      %p400 = pneg %p196
      %p401 = pneg %p193
      %p402 = pneg %p217
      %p403 = pneg %p214
      %p404 = pneg %p238
      %p405 = pneg %p235
      %p406 = pneg %p259
      %p407 = pneg %p256
      %p408 = pneg %p280
      %p409 = pneg %p277
      %p410 = pneg %p306
      %p411 = pneg %p303
      %p412 = scmp.lt.s32.totalorder %s23, 1
      %s413 = scalar_select %p412, %s23, 1
      %s414 = smul.addr %s413, 6
      %s415 = smul.addr %s414, 8
      %s416 = scalar_lea.vmem %s12, %s415
      %p417 = scmp.lt.s32.totalorder %s23, 1
      %s418 = scalar_select %p417, %s23, 1
      %s419 = smul.addr %s418, 3
      %s420 = smul.addr %s419, 8
      %s421 = scalar_lea.vmem %s0, %s420
      %p422 = scmp.lt.s32.totalorder %s23, 1
      %s423 = scalar_select %p422, %s23, 1
      %s424 = smul.addr %s423, 8
      %s425 = scalar_lea.vmem %s1, %s424
      %p426 = scmp.lt.s32.totalorder %s23, 1
      %s427 = scalar_select %p426, %s23, 1
      %s428 = smul.addr %s427, 6
      %s429 = smul.addr %s428, 8
      %s430 = scalar_lea.vmem %s12, %s429
      %v431 = vld [vmem:[%s2] sm:$0x7]
      %v432 = vld [vmem:[%s11] sm:$0xff]
      %v433 = vld [vmem:[%s11 + $0x8] sm:$0xff]
      %v434 = vld [vmem:[%s421] sm:$0xff]
      %v435 = vld [vmem:[%s421 + $0x8] sm:$0xff]
      %v436 = vld [vmem:[%s421 + $0x10] sm:$0xff]
      %437 = vst [vmem:[#allocation2] sm:$0xff] %v434
      %438 = vst [vmem:[#allocation2 + $0x8] sm:$0xff] %v435
      %vm439 = vcmask 261120
      %440 = vst.msk [vmem:[#allocation2 + $0x10] sm:$0xff] %vm439, %v436
      %v441 = vld [vmem:[%s421] sm:$0xff]
      %v442 = vld [vmem:[%s421 + $0x8] sm:$0xff]
      %v443 = vld [vmem:[%s421 + $0x10] sm:$0xff]
      %447 = vrot.lane.b32.xlu0 %v441, 127
      %v448 = vpop.permute.xlu0 %447
      %449 = vrot.lane.b32.xlu0 %v442, 127
      %v450 = vpop.permute.xlu0 %449
      %451 = vrot.lane.b32.xlu0 %v443, 127
      %v452 = vpop.permute.xlu0 %451
      %vm453 = vcmask 1039360
      %v454 = vsel %vm453, %v448, %v450
      %v455 = vsel %vm453, %v450, %v452
      %459 = vst [vmem:[#allocation2 + $0x18] sm:$0xff] %v454
      %460 = vst [vmem:[#allocation2 + $0x20] sm:$0xff] %v455
      %461 = vst.msk [vmem:[#allocation2 + $0x28] sm:$0xff] %vm439, %v452
      %v462 = vld [vmem:[%s421] sm:$0xff]
      %v463 = vld [vmem:[%s421 + $0x8] sm:$0xff]
      %v464 = vld [vmem:[%s421 + $0x10] sm:$0xff]
      %468 = vrot.lane.b32.xlu0 %v462, 126
      %v469 = vpop.permute.xlu0 %468
      %470 = vrot.lane.b32.xlu0 %v463, 126
      %v471 = vpop.permute.xlu0 %470
      %472 = vrot.lane.b32.xlu0 %v464, 126
      %v473 = vpop.permute.xlu0 %472
      %vm474 = vcmask 1031168
      %v475 = vsel %vm474, %v469, %v471
      %v476 = vsel %vm474, %v471, %v473
      %480 = vst [vmem:[#allocation2 + $0x30] sm:$0xff] %v475
      %481 = vst [vmem:[#allocation2 + $0x38] sm:$0xff] %v476
      %482 = vst.msk [vmem:[#allocation2 + $0x40] sm:$0xff] %vm439, %v473
      %v483 = vld [vmem:[%s421] sm:$0xff]
      %v484 = vld [vmem:[%s421 + $0x8] sm:$0xff]
      %v485 = vld [vmem:[%s421 + $0x10] sm:$0xff]
      %489 = vrot.lane.b32.xlu0 %v483, 110
      %v490 = vpop.permute.xlu0 %489
      %491 = vrot.lane.b32.xlu0 %v484, 110
      %v492 = vpop.permute.xlu0 %491
      %493 = vrot.lane.b32.xlu0 %v485, 110
      %v494 = vpop.permute.xlu0 %493
      %vm495 = vcmask 900096
      %v496 = vsel %vm495, %v490, %v492
      %v497 = vsel %vm495, %v492, %v494
      %501 = vst [vmem:[#allocation2 + $0x48] sm:$0xff] %v496
      %502 = vst [vmem:[#allocation2 + $0x50] sm:$0xff] %v497
      %503 = vst.msk [vmem:[#allocation2 + $0x58] sm:$0xff] %vm439, %v494
      %v504 = vld [vmem:[%s421] sm:$0xff]
      %v505 = vld [vmem:[%s421 + $0x8] sm:$0xff]
      %v506 = vld [vmem:[%s421 + $0x10] sm:$0xff]
      %510 = vrot.lane.b32.xlu0 %v504, 109
      %v511 = vpop.permute.xlu0 %510
      %512 = vrot.lane.b32.xlu0 %v505, 109
      %v513 = vpop.permute.xlu0 %512
      %514 = vrot.lane.b32.xlu0 %v506, 109
      %v515 = vpop.permute.xlu0 %514
      %vm516 = vcmask 891904
      %v517 = vsel %vm516, %v511, %v513
      %v518 = vsel %vm516, %v513, %v515
      %522 = vst [vmem:[#allocation2 + $0x60] sm:$0xff] %v517
      %523 = vst [vmem:[#allocation2 + $0x68] sm:$0xff] %v518
      %524 = vst.msk [vmem:[#allocation2 + $0x70] sm:$0xff] %vm439, %v515
      %v525 = vld [vmem:[%s421] sm:$0xff]
      %v526 = vld [vmem:[%s421 + $0x8] sm:$0xff]
      %v527 = vld [vmem:[%s421 + $0x10] sm:$0xff]
      %531 = vrot.lane.b32.xlu0 %v525, 108
      %v532 = vpop.permute.xlu0 %531
      %533 = vrot.lane.b32.xlu0 %v526, 108
      %v534 = vpop.permute.xlu0 %533
      %535 = vrot.lane.b32.xlu0 %v527, 108
      %v536 = vpop.permute.xlu0 %535
      %vm537 = vcmask 883712
      %v538 = vsel %vm537, %v532, %v534
      %v539 = vsel %vm537, %v534, %v536
      %543 = vst [vmem:[#allocation2 + $0x78] sm:$0xff] %v538
      %544 = vst [vmem:[#allocation2 + $0x80] sm:$0xff] %v539
      %545 = vst.msk [vmem:[#allocation2 + $0x88] sm:$0xff] %vm439, %v536
      %v546 = vld [vmem:[%s421] sm:$0xff]
      %v547 = vld [vmem:[%s421 + $0x8] sm:$0xff]
      %v548 = vld [vmem:[%s421 + $0x10] sm:$0xff]
      %552 = vrot.lane.b32.xlu0 %v546, 92
      %v553 = vpop.permute.xlu0 %552
      %554 = vrot.lane.b32.xlu0 %v547, 92
      %v555 = vpop.permute.xlu0 %554
      %556 = vrot.lane.b32.xlu0 %v548, 92
      %v557 = vpop.permute.xlu0 %556
      %vm558 = vcmask 752640
      %v559 = vsel %vm558, %v553, %v555
      %v560 = vsel %vm558, %v555, %v557
      %564 = vst [vmem:[#allocation2 + $0x90] sm:$0xff] %v559
      %565 = vst [vmem:[#allocation2 + $0x98] sm:$0xff] %v560
      %566 = vst.msk [vmem:[#allocation2 + $0xa0] sm:$0xff] %vm439, %v557
      %v567 = vld [vmem:[%s421] sm:$0xff]
      %v568 = vld [vmem:[%s421 + $0x8] sm:$0xff]
      %v569 = vld [vmem:[%s421 + $0x10] sm:$0xff]
      %573 = vrot.lane.b32.xlu0 %v567, 91
      %v574 = vpop.permute.xlu0 %573
      %575 = vrot.lane.b32.xlu0 %v568, 91
      %v576 = vpop.permute.xlu0 %575
      %577 = vrot.lane.b32.xlu0 %v569, 91
      %v578 = vpop.permute.xlu0 %577
      %vm579 = vcmask 744448
      %v580 = vsel %vm579, %v574, %v576
      %v581 = vsel %vm579, %v576, %v578
      %585 = vst [vmem:[#allocation2 + $0xa8] sm:$0xff] %v580
      %586 = vst [vmem:[#allocation2 + $0xb0] sm:$0xff] %v581
      %587 = vst.msk [vmem:[#allocation2 + $0xb8] sm:$0xff] %vm439, %v578
      %v588 = vld [vmem:[%s421] sm:$0xff]
      %v589 = vld [vmem:[%s421 + $0x8] sm:$0xff]
      %v590 = vld [vmem:[%s421 + $0x10] sm:$0xff]
      %594 = vrot.lane.b32.xlu0 %v588, 90
      %v595 = vpop.permute.xlu0 %594
      %596 = vrot.lane.b32.xlu0 %v589, 90
      %v597 = vpop.permute.xlu0 %596
      %598 = vrot.lane.b32.xlu0 %v590, 90
      %v599 = vpop.permute.xlu0 %598
      %vm600 = vcmask 736256
      %v601 = vsel %vm600, %v595, %v597
      %v602 = vsel %vm600, %v597, %v599
      %606 = vst [vmem:[#allocation2 + $0xc0] sm:$0xff] %v601
      %607 = vst [vmem:[#allocation2 + $0xc8] sm:$0xff] %v602
      %608 = vst.msk [vmem:[#allocation2 + $0xd0] sm:$0xff] %vm439, %v599
      %v609 = vld [vmem:[%s3] sm:$0xff]
      %v610 = vld [vmem:[%s3 + $0x8] sm:$0xff]
      %v611 = vld [vmem:[#allocation2] sm:$0xff]
      %v612 = vld [vmem:[#allocation2 + $0x8] sm:$0xff]
      %v613 = vld [vmem:[#allocation2 + $0x10] sm:$0xff]
      %v614 = vld [vmem:[#allocation2 + $0x18] sm:$0xff]
      %v615 = vld [vmem:[#allocation2 + $0x20] sm:$0xff]
      %v616 = vld [vmem:[#allocation2 + $0x28] sm:$0xff]
      %v617 = vld [vmem:[#allocation2 + $0x30] sm:$0xff]
      %v618 = vld [vmem:[#allocation2 + $0x38] sm:$0xff]
      %v619 = vld [vmem:[#allocation2 + $0x40] sm:$0xff]
      %v620 = vld [vmem:[#allocation2 + $0x48] sm:$0xff]
      %v621 = vld [vmem:[#allocation2 + $0x50] sm:$0xff]
      %v622 = vld [vmem:[#allocation2 + $0x58] sm:$0xff]
      %v623 = vld [vmem:[#allocation2 + $0x60] sm:$0xff]
      %v624 = vld [vmem:[#allocation2 + $0x68] sm:$0xff]
      %v625 = vld [vmem:[#allocation2 + $0x70] sm:$0xff]
      %v626 = vld [vmem:[#allocation2 + $0x78] sm:$0xff]
      %v627 = vld [vmem:[#allocation2 + $0x80] sm:$0xff]
      %v628 = vld [vmem:[#allocation2 + $0x88] sm:$0xff]
      %v629 = vld [vmem:[#allocation2 + $0x90] sm:$0xff]
      %v630 = vld [vmem:[#allocation2 + $0x98] sm:$0xff]
      %v631 = vld [vmem:[#allocation2 + $0xa0] sm:$0xff]
      %v632 = vld [vmem:[#allocation2 + $0xa8] sm:$0xff]
      %v633 = vld [vmem:[#allocation2 + $0xb0] sm:$0xff]
      %v634 = vld [vmem:[#allocation2 + $0xb8] sm:$0xff]
      %v635 = vld [vmem:[#allocation2 + $0xc0] sm:$0xff]
      %v636 = vld [vmem:[#allocation2 + $0xc8] sm:$0xff]
      %v637 = vld [vmem:[#allocation2 + $0xd0] sm:$0xff]
      %v638 = vld [vmem:[%s4] sm:$0xff]
      %v639 = vld [vmem:[%s4 + $0x8] sm:$0xff]
      %641 = vset.pattern.permute.xlu0 0
      %642 = vperm.xlu0 %641, %v638
      %v643 = vpop.permute.xlu0 %642
      %646 = vset.pattern.permute.xlu0 0
      %647 = vperm.xlu0 %646, %v639
      %v648 = vpop.permute.xlu0 %647
      %vm650 = vcmask 588800
      %v652 = vsel %vm650, %v609, 0
      %v655 = vsel %vm650, %v610, 0
      %657 = vmatprep.subr.mxu0 %v612
      %658 = vmatpush1.msra.mxu0 %v611
      %659 = vmatprep.subr.mxu0 %v615
      %660 = vmatpush1.msra.mxu0 %v614
      %661 = vmatprep.subr.mxu0 %v618
      %662 = vmatpush1.msra.mxu0 %v617
      %663 = vmatprep.subr.mxu0 %v621
      %664 = vmatpush1.msra.mxu0 %v620
      %665 = vmatprep.subr.mxu0 %v624
      %666 = vmatpush1.msra.mxu0 %v623
      %667 = vmatprep.subr.mxu0 %v627
      %668 = vmatpush1.msra.mxu0 %v626
      %669 = vmatprep.subr.mxu0 %v630
      %670 = vmatpush1.msra.mxu0 %v629
      %671 = vmatprep.subr.mxu0 %v633
      %672 = vmatpush1.msra.mxu0 %v632
      %673 = vmatprep.subr.mxu0 %v636
      %674 = vmatpush1.msra.mxu0 %v635
      %675 = vmatprep.subr.mxu0 0.0
      %676 = vmatpush1.msra.mxu0 0.0
      %677 = vmatprep.subr.mxu0 0.0
      %678 = vmatpush1.msra.mxu0 0.0
      %679 = vmatprep.subr.mxu0 0.0
      %680 = vmatpush1.msra.mxu0 0.0
      %681 = vmatprep.subr.mxu0 0.0
      %682 = vmatpush1.msra.mxu0 0.0
      %683 = vmatprep.subr.mxu0 0.0
      %684 = vmatpush1.msra.mxu0 0.0
      %685 = vmatprep.subr.mxu0 0.0
      %686 = vmatpush1.msra.mxu0 0.0
      %687 = vmatprep.subr.mxu0 0.0
      %688 = vmatpush1.msra.mxu0 0.0
      %689 = vmatprep.subr.mxu0 0.0
      %690 = vmatpush1.msra.mxu0 0.0
      %691 = vmatprep.subr.mxu0 0.0
      %692 = vmatpush1.msra.mxu0 0.0
      %693 = vmatprep.subr.mxu0 0.0
      %694 = vmatpush1.msra.mxu0 0.0
      %695 = vmatprep.subr.mxu0 0.0
      %696 = vmatpush1.msra.mxu0 0.0
      %697 = vmatprep.subr.mxu0 0.0
      %698 = vmatpush1.msra.mxu0 0.0
      %699 = vmatprep.subr.mxu0 0.0
      %700 = vmatpush1.msra.mxu0 0.0
      %701 = vmatprep.subr.mxu0 0.0
      %702 = vmatpush1.msra.mxu0 0.0
      %703 = vmatprep.subr.mxu0 0.0
      %704 = vmatpush1.msra.mxu0 0.0
      %705 = vmatprep.subr.mxu0 0.0
      %706 = vmatpush1.msra.mxu0 0.0
      %707 = vmatprep.subr.mxu0 0.0
      %708 = vmatpush1.msra.mxu0 0.0
      %709 = vmatprep.subr.mxu0 0.0
      %710 = vmatpush1.msra.mxu0 0.0
      %711 = vmatprep.subr.mxu0 0.0
      %712 = vmatpush1.msra.mxu0 0.0
      %713 = vmatprep.subr.mxu0 0.0
      %714 = vmatpush1.msra.mxu0 0.0
      %715 = vmatprep.subr.mxu0 0.0
      %716 = vmatpush1.msra.mxu0 0.0
      %717 = vmatprep.subr.mxu0 0.0
      %718 = vmatpush1.msra.mxu0 0.0
      %719 = vmatprep.subr.mxu0 0.0
      %720 = vmatpush1.msra.mxu0 0.0
      %721 = vmatprep.mubr.f32.mxu0 0.0
      %722 = vmatmul.mubr.f32.gmra.mrb[0].mxu0 %v652
      %v723 = vpop.f32.mrb[0].mxu0
      %v724 = vadd.f32 %v643, %v723
      %v725 = vpop.f32.mrb[0].mxu0
      %v726 = vadd.f32 %v643, %v725
      %727 = vmatprep.mubr.f32.mxu0 0.0
      %728 = vmatmul.mubr.f32.gmra.mrb[0].mxu0 %v655
      %v729 = vpop.f32.mrb[0].mxu0
      %v730 = vadd.f32 %v648, %v729
      %v731 = vpop.f32.mrb[0].mxu0
      %v732 = vadd.f32 %v648, %v731
      %733 = vdwg.mxu0
      %734 = vmatprep.subr.mxu0 0.0
      %735 = vmatpush1.msra.mxu0 %v613
      %736 = vmatprep.subr.mxu0 0.0
      %737 = vmatpush1.msra.mxu0 %v616
      %738 = vmatprep.subr.mxu0 0.0
      %739 = vmatpush1.msra.mxu0 %v619
      %740 = vmatprep.subr.mxu0 0.0
      %741 = vmatpush1.msra.mxu0 %v622
      %742 = vmatprep.subr.mxu0 0.0
      %743 = vmatpush1.msra.mxu0 %v625
      %744 = vmatprep.subr.mxu0 0.0
      %745 = vmatpush1.msra.mxu0 %v628
      %746 = vmatprep.subr.mxu0 0.0
      %747 = vmatpush1.msra.mxu0 %v631
      %748 = vmatprep.subr.mxu0 0.0
      %749 = vmatpush1.msra.mxu0 %v634
      %750 = vmatprep.subr.mxu0 0.0
      %751 = vmatpush1.msra.mxu0 %v637
      %752 = vmatprep.subr.mxu0 0.0
      %753 = vmatpush1.msra.mxu0 0.0
      %754 = vmatprep.subr.mxu0 0.0
      %755 = vmatpush1.msra.mxu0 0.0
      %756 = vmatprep.subr.mxu0 0.0
      %757 = vmatpush1.msra.mxu0 0.0
      %758 = vmatprep.subr.mxu0 0.0
      %759 = vmatpush1.msra.mxu0 0.0
      %760 = vmatprep.subr.mxu0 0.0
      %761 = vmatpush1.msra.mxu0 0.0
      %762 = vmatprep.subr.mxu0 0.0
      %763 = vmatpush1.msra.mxu0 0.0
      %764 = vmatprep.subr.mxu0 0.0
      %765 = vmatpush1.msra.mxu0 0.0
      %766 = vmatprep.subr.mxu0 0.0
      %767 = vmatpush1.msra.mxu0 0.0
      %768 = vmatprep.subr.mxu0 0.0
      %769 = vmatpush1.msra.mxu0 0.0
      %770 = vmatprep.subr.mxu0 0.0
      %771 = vmatpush1.msra.mxu0 0.0
      %772 = vmatprep.subr.mxu0 0.0
      %773 = vmatpush1.msra.mxu0 0.0
      %774 = vmatprep.subr.mxu0 0.0
      %775 = vmatpush1.msra.mxu0 0.0
      %776 = vmatprep.subr.mxu0 0.0
      %777 = vmatpush1.msra.mxu0 0.0
      %778 = vmatprep.subr.mxu0 0.0
      %779 = vmatpush1.msra.mxu0 0.0
      %780 = vmatprep.subr.mxu0 0.0
      %781 = vmatpush1.msra.mxu0 0.0
      %782 = vmatprep.subr.mxu0 0.0
      %783 = vmatpush1.msra.mxu0 0.0
      %784 = vmatprep.subr.mxu0 0.0
      %785 = vmatpush1.msra.mxu0 0.0
      %786 = vmatprep.subr.mxu0 0.0
      %787 = vmatpush1.msra.mxu0 0.0
      %788 = vmatprep.subr.mxu0 0.0
      %789 = vmatpush1.msra.mxu0 0.0
      %790 = vmatprep.subr.mxu0 0.0
      %791 = vmatpush1.msra.mxu0 0.0
      %792 = vmatprep.subr.mxu0 0.0
      %793 = vmatpush1.msra.mxu0 0.0
      %794 = vmatprep.subr.mxu0 0.0
      %795 = vmatpush1.msra.mxu0 0.0
      %796 = vmatprep.subr.mxu0 0.0
      %797 = vmatpush1.msra.mxu0 0.0
      %798 = vmatprep.mubr.f32.mxu0 0.0
      %799 = vmatmul.mubr.f32.gmra.mrb[0].mxu0 %v652
      %v800 = vpop.f32.mrb[0].mxu0
      %v801 = vadd.f32 %v643, %v800
      %v802 = vpop.f32.mrb[0].mxu0
      %803 = vmatprep.mubr.f32.mxu0 0.0
      %804 = vmatmul.mubr.f32.gmra.mrb[0].mxu0 %v655
      %v805 = vpop.f32.mrb[0].mxu0
      %v806 = vadd.f32 %v648, %v805
      %v807 = vpop.f32.mrb[0].mxu0
      %808 = vdwg.mxu0
      %v809 = vld [vmem:[%s5] sm:$0xff]
      %v810 = vld [vmem:[%s5 + $0x8] sm:$0xff]
      %v811 = vld [vmem:[%s6] sm:$0xff]
      %v812 = vld [vmem:[%s6 + $0x8] sm:$0xff]
      %v814 = vlaneseq
      %v815 = vshrl.u32 %v814, 7
      %v816 = vsub.s32 0, %v815
      %v817 = vrot.slane %v431, %v816
      %v818 = vlaneseq
      %v819 = vshrl.u32 %v818, 7
      %v820 = vsub.s32 1, %v819
      %v821 = vrot.slane %v431, %v820
      %v822 = vlaneseq
      %v823 = vshrl.u32 %v822, 7
      %v824 = vsub.s32 2, %v823
      %v825 = vrot.slane %v431, %v824
      %826 = vrot.lane.b32.xlu0 %v817, 109
      %v827 = vpop.permute.xlu0 %826
      %828 = vrot.lane.b32.xlu0 %v821, 109
      %v829 = vpop.permute.xlu0 %828
      %830 = vrot.lane.b32.xlu0 %v825, 109
      %v831 = vpop.permute.xlu0 %830
      %v832 = vsel %vm516, %v827, %v829
      %v833 = vsel %vm516, %v829, %v831
      %v837 = vmul.f32 %v724, %v832
      %v838 = vmul.f32 %v726, %v833
      %v839 = vmul.f32 %v801, %v831
      %v840 = vmul.f32 %v730, %v832
      %v841 = vmul.f32 %v732, %v833
      %v842 = vmul.f32 %v806, %v831
      %vm843 = vcmask 130048
      %v845 = vsel %vm843, %v432, 0
      %v848 = vsel %vm843, %v433, 0
      %850 = vmatprep.subr.mxu0 %v838
      %851 = vmatpush1.msra.mxu0 %v837
      %852 = vmatprep.subr.mxu0 %v841
      %853 = vmatpush1.msra.mxu0 %v840
      %854 = vmatprep.subr.mxu0 0.0
      %855 = vmatpush1.msra.mxu0 0.0
      %856 = vmatprep.subr.mxu0 0.0
      %857 = vmatpush1.msra.mxu0 0.0
      %858 = vmatprep.subr.mxu0 0.0
      %859 = vmatpush1.msra.mxu0 0.0
      %860 = vmatprep.subr.mxu0 0.0
      %861 = vmatpush1.msra.mxu0 0.0
      %862 = vmatprep.subr.mxu0 0.0
      %863 = vmatpush1.msra.mxu0 0.0
      %864 = vmatprep.subr.mxu0 0.0
      %865 = vmatpush1.msra.mxu0 0.0
      %866 = vmatprep.subr.mxu0 0.0
      %867 = vmatpush1.msra.mxu0 0.0
      %868 = vmatprep.subr.mxu0 0.0
      %869 = vmatpush1.msra.mxu0 0.0
      %870 = vmatprep.subr.mxu0 0.0
      %871 = vmatpush1.msra.mxu0 0.0
      %872 = vmatprep.subr.mxu0 0.0
      %873 = vmatpush1.msra.mxu0 0.0
      %874 = vmatprep.subr.mxu0 0.0
      %875 = vmatpush1.msra.mxu0 0.0
      %876 = vmatprep.subr.mxu0 0.0
      %877 = vmatpush1.msra.mxu0 0.0
      %878 = vmatprep.subr.mxu0 0.0
      %879 = vmatpush1.msra.mxu0 0.0
      %880 = vmatprep.subr.mxu0 0.0
      %881 = vmatpush1.msra.mxu0 0.0
      %882 = vmatprep.subr.mxu0 0.0
      %883 = vmatpush1.msra.mxu0 0.0
      %884 = vmatprep.subr.mxu0 0.0
      %885 = vmatpush1.msra.mxu0 0.0
      %886 = vmatprep.subr.mxu0 0.0
      %887 = vmatpush1.msra.mxu0 0.0
      %888 = vmatprep.subr.mxu0 0.0
      %889 = vmatpush1.msra.mxu0 0.0
      %890 = vmatprep.subr.mxu0 0.0
      %891 = vmatpush1.msra.mxu0 0.0
      %892 = vmatprep.subr.mxu0 0.0
      %893 = vmatpush1.msra.mxu0 0.0
      %894 = vmatprep.subr.mxu0 0.0
      %895 = vmatpush1.msra.mxu0 0.0
      %896 = vmatprep.subr.mxu0 0.0
      %897 = vmatpush1.msra.mxu0 0.0
      %898 = vmatprep.subr.mxu0 0.0
      %899 = vmatpush1.msra.mxu0 0.0
      %900 = vmatprep.subr.mxu0 0.0
      %901 = vmatpush1.msra.mxu0 0.0
      %902 = vmatprep.subr.mxu0 0.0
      %903 = vmatpush1.msra.mxu0 0.0
      %904 = vmatprep.subr.mxu0 0.0
      %905 = vmatpush1.msra.mxu0 0.0
      %906 = vmatprep.subr.mxu0 0.0
      %907 = vmatpush1.msra.mxu0 0.0
      %908 = vmatprep.subr.mxu0 0.0
      %909 = vmatpush1.msra.mxu0 0.0
      %910 = vmatprep.subr.mxu0 0.0
      %911 = vmatpush1.msra.mxu0 0.0
      %912 = vmatprep.subr.mxu0 0.0
      %913 = vmatpush1.msra.mxu0 0.0
      %914 = vmatprep.mubr.f32.mxu0 0.0
      %915 = vmatmul.mubr.f32.gmra.mrb[0].mxu0 %v845
      %v916 = vpop.f32.mrb[0].mxu0
      %v917 = vadd.f32 0.0, %v916
      %v918 = vpop.f32.mrb[0].mxu0
      %v919 = vadd.f32 0.0, %v918
      %920 = vmatprep.mubr.f32.mxu0 0.0
      %921 = vmatmul.mubr.f32.gmra.mrb[0].mxu0 %v848
      %v922 = vpop.f32.mrb[0].mxu0
      %v923 = vadd.f32 0.0, %v922
      %v924 = vpop.f32.mrb[0].mxu0
      %v925 = vadd.f32 0.0, %v924
      %926 = vdwg.mxu0
      %927 = vmatprep.subr.mxu0 0.0
      %928 = vmatpush1.msra.mxu0 %v839
      %929 = vmatprep.subr.mxu0 0.0
      %930 = vmatpush1.msra.mxu0 %v842
      %931 = vmatprep.subr.mxu0 0.0
      %932 = vmatpush1.msra.mxu0 0.0
      %933 = vmatprep.subr.mxu0 0.0
      %934 = vmatpush1.msra.mxu0 0.0
      %935 = vmatprep.subr.mxu0 0.0
      %936 = vmatpush1.msra.mxu0 0.0
      %937 = vmatprep.subr.mxu0 0.0
      %938 = vmatpush1.msra.mxu0 0.0
      %939 = vmatprep.subr.mxu0 0.0
      %940 = vmatpush1.msra.mxu0 0.0
      %941 = vmatprep.subr.mxu0 0.0
      %942 = vmatpush1.msra.mxu0 0.0
      %943 = vmatprep.subr.mxu0 0.0
      %944 = vmatpush1.msra.mxu0 0.0
      %945 = vmatprep.subr.mxu0 0.0
      %946 = vmatpush1.msra.mxu0 0.0
      %947 = vmatprep.subr.mxu0 0.0
      %948 = vmatpush1.msra.mxu0 0.0
      %949 = vmatprep.subr.mxu0 0.0
      %950 = vmatpush1.msra.mxu0 0.0
      %951 = vmatprep.subr.mxu0 0.0
      %952 = vmatpush1.msra.mxu0 0.0
      %953 = vmatprep.subr.mxu0 0.0
      %954 = vmatpush1.msra.mxu0 0.0
      %955 = vmatprep.subr.mxu0 0.0
      %956 = vmatpush1.msra.mxu0 0.0
      %957 = vmatprep.subr.mxu0 0.0
      %958 = vmatpush1.msra.mxu0 0.0
      %959 = vmatprep.subr.mxu0 0.0
      %960 = vmatpush1.msra.mxu0 0.0
      %961 = vmatprep.subr.mxu0 0.0
      %962 = vmatpush1.msra.mxu0 0.0
      %963 = vmatprep.subr.mxu0 0.0
      %964 = vmatpush1.msra.mxu0 0.0
      %965 = vmatprep.subr.mxu0 0.0
      %966 = vmatpush1.msra.mxu0 0.0
      %967 = vmatprep.subr.mxu0 0.0
      %968 = vmatpush1.msra.mxu0 0.0
      %969 = vmatprep.subr.mxu0 0.0
      %970 = vmatpush1.msra.mxu0 0.0
      %971 = vmatprep.subr.mxu0 0.0
      %972 = vmatpush1.msra.mxu0 0.0
      %973 = vmatprep.subr.mxu0 0.0
      %974 = vmatpush1.msra.mxu0 0.0
      %975 = vmatprep.subr.mxu0 0.0
      %976 = vmatpush1.msra.mxu0 0.0
      %977 = vmatprep.subr.mxu0 0.0
      %978 = vmatpush1.msra.mxu0 0.0
      %979 = vmatprep.subr.mxu0 0.0
      %980 = vmatpush1.msra.mxu0 0.0
      %981 = vmatprep.subr.mxu0 0.0
      %982 = vmatpush1.msra.mxu0 0.0
      %983 = vmatprep.subr.mxu0 0.0
      %984 = vmatpush1.msra.mxu0 0.0
      %985 = vmatprep.subr.mxu0 0.0
      %986 = vmatpush1.msra.mxu0 0.0
      %987 = vmatprep.subr.mxu0 0.0
      %988 = vmatpush1.msra.mxu0 0.0
      %989 = vmatprep.subr.mxu0 0.0
      %990 = vmatpush1.msra.mxu0 0.0
      %991 = vmatprep.mubr.f32.mxu0 0.0
      %992 = vmatmul.mubr.f32.gmra.mrb[0].mxu0 %v845
      %v993 = vpop.f32.mrb[0].mxu0
      %v994 = vadd.f32 0.0, %v993
      %v995 = vpop.f32.mrb[0].mxu0
      %996 = vmatprep.mubr.f32.mxu0 0.0
      %997 = vmatmul.mubr.f32.gmra.mrb[0].mxu0 %v848
      %v998 = vpop.f32.mrb[0].mxu0
      %v999 = vadd.f32 0.0, %v998
      %v1000 = vpop.f32.mrb[0].mxu0
      %1001 = vdwg.mxu0
      %v1002 = vadd.f32 %v917, %v919
      %v1003 = vsel %vm439, %v994, 0.0
      %v1004 = vadd.f32 %v1002, %v1003
      %1005 = vadd.xlane.f32.xlu0 %v1004
      %v1006 = vpop.xlane.xlu0 %1005
      %v1007 = vadd.f32 %v923, %v925
      %v1008 = vsel %vm439, %v999, 0.0
      %v1009 = vadd.f32 %v1007, %v1008
      %1010 = vadd.xlane.f32.xlu0 %v1009
      %v1011 = vpop.xlane.xlu0 %1010
      %v1012 = vmul.f32 %v1006, 0.001953125
      %v1013 = vmul.f32 %v1011, 0.001953125
      %v1014 = vsub.f32 %v724, %v1012
      %v1015 = vsub.f32 %v726, %v1012
      %v1016 = vsub.f32 %v801, %v1012
      %v1017 = vsub.f32 %v730, %v1013
      %v1018 = vsub.f32 %v732, %v1013
      %v1019 = vsub.f32 %v806, %v1013
      %v1020 = vmul.f32 %v1014, %v832
      %v1021 = vmul.f32 %v1015, %v833
      %v1022 = vmul.f32 %v1016, %v831
      %v1023 = vmul.f32 %v1017, %v832
      %v1024 = vmul.f32 %v1018, %v833
      %v1025 = vmul.f32 %v1019, %v831
      %v1026 = vmul.f32 %v1020, %v1020
      %v1027 = vmul.f32 %v1021, %v1021
      %v1028 = vmul.f32 %v1022, %v1022
      %v1029 = vmul.f32 %v1023, %v1023
      %v1030 = vmul.f32 %v1024, %v1024
      %v1031 = vmul.f32 %v1025, %v1025
      %1032 = vmatprep.subr.mxu0 %v1027
      %1033 = vmatpush1.msra.mxu0 %v1026
      %1034 = vmatprep.subr.mxu0 %v1030
      %1035 = vmatpush1.msra.mxu0 %v1029
      %1036 = vmatprep.subr.mxu0 0.0
      %1037 = vmatpush1.msra.mxu0 0.0
      %1038 = vmatprep.subr.mxu0 0.0
      %1039 = vmatpush1.msra.mxu0 0.0
      %1040 = vmatprep.subr.mxu0 0.0
      %1041 = vmatpush1.msra.mxu0 0.0
      %1042 = vmatprep.subr.mxu0 0.0
      %1043 = vmatpush1.msra.mxu0 0.0
      %1044 = vmatprep.subr.mxu0 0.0
      %1045 = vmatpush1.msra.mxu0 0.0
      %1046 = vmatprep.subr.mxu0 0.0
      %1047 = vmatpush1.msra.mxu0 0.0
      %1048 = vmatprep.subr.mxu0 0.0
      %1049 = vmatpush1.msra.mxu0 0.0
      %1050 = vmatprep.subr.mxu0 0.0
      %1051 = vmatpush1.msra.mxu0 0.0
      %1052 = vmatprep.subr.mxu0 0.0
      %1053 = vmatpush1.msra.mxu0 0.0
      %1054 = vmatprep.subr.mxu0 0.0
      %1055 = vmatpush1.msra.mxu0 0.0
      %1056 = vmatprep.subr.mxu0 0.0
      %1057 = vmatpush1.msra.mxu0 0.0
      %1058 = vmatprep.subr.mxu0 0.0
      %1059 = vmatpush1.msra.mxu0 0.0
      %1060 = vmatprep.subr.mxu0 0.0
      %1061 = vmatpush1.msra.mxu0 0.0
      %1062 = vmatprep.subr.mxu0 0.0
      %1063 = vmatpush1.msra.mxu0 0.0
      %1064 = vmatprep.subr.mxu0 0.0
      %1065 = vmatpush1.msra.mxu0 0.0
      %1066 = vmatprep.subr.mxu0 0.0
      %1067 = vmatpush1.msra.mxu0 0.0
      %1068 = vmatprep.subr.mxu0 0.0
      %1069 = vmatpush1.msra.mxu0 0.0
      %1070 = vmatprep.subr.mxu0 0.0
      %1071 = vmatpush1.msra.mxu0 0.0
      %1072 = vmatprep.subr.mxu0 0.0
      %1073 = vmatpush1.msra.mxu0 0.0
      %1074 = vmatprep.subr.mxu0 0.0
      %1075 = vmatpush1.msra.mxu0 0.0
      %1076 = vmatprep.subr.mxu0 0.0
      %1077 = vmatpush1.msra.mxu0 0.0
      %1078 = vmatprep.subr.mxu0 0.0
      %1079 = vmatpush1.msra.mxu0 0.0
      %1080 = vmatprep.subr.mxu0 0.0
      %1081 = vmatpush1.msra.mxu0 0.0
      %1082 = vmatprep.subr.mxu0 0.0
      %1083 = vmatpush1.msra.mxu0 0.0
      %1084 = vmatprep.subr.mxu0 0.0
      %1085 = vmatpush1.msra.mxu0 0.0
      %1086 = vmatprep.subr.mxu0 0.0
      %1087 = vmatpush1.msra.mxu0 0.0
      %1088 = vmatprep.subr.mxu0 0.0
      %1089 = vmatpush1.msra.mxu0 0.0
      %1090 = vmatprep.subr.mxu0 0.0
      %1091 = vmatpush1.msra.mxu0 0.0
      %1092 = vmatprep.subr.mxu0 0.0
      %1093 = vmatpush1.msra.mxu0 0.0
      %1094 = vmatprep.subr.mxu0 0.0
      %1095 = vmatpush1.msra.mxu0 0.0
      %1096 = vmatprep.mubr.f32.mxu0 0.0
      %1097 = vmatmul.mubr.f32.gmra.mrb[0].mxu0 %v845
      %v1098 = vpop.f32.mrb[0].mxu0
      %v1099 = vadd.f32 0.0, %v1098
      %v1100 = vpop.f32.mrb[0].mxu0
      %v1101 = vadd.f32 0.0, %v1100
      %1102 = vmatprep.mubr.f32.mxu0 0.0
      %1103 = vmatmul.mubr.f32.gmra.mrb[0].mxu0 %v848
      %v1104 = vpop.f32.mrb[0].mxu0
      %v1105 = vadd.f32 0.0, %v1104
      %v1106 = vpop.f32.mrb[0].mxu0
      %v1107 = vadd.f32 0.0, %v1106
      %1108 = vdwg.mxu0
      %1109 = vmatprep.subr.mxu0 0.0
      %1110 = vmatpush1.msra.mxu0 %v1028
      %1111 = vmatprep.subr.mxu0 0.0
      %1112 = vmatpush1.msra.mxu0 %v1031
      %1113 = vmatprep.subr.mxu0 0.0
      %1114 = vmatpush1.msra.mxu0 0.0
      %1115 = vmatprep.subr.mxu0 0.0
      %1116 = vmatpush1.msra.mxu0 0.0
      %1117 = vmatprep.subr.mxu0 0.0
      %1118 = vmatpush1.msra.mxu0 0.0
      %1119 = vmatprep.subr.mxu0 0.0
      %1120 = vmatpush1.msra.mxu0 0.0
      %1121 = vmatprep.subr.mxu0 0.0
      %1122 = vmatpush1.msra.mxu0 0.0
      %1123 = vmatprep.subr.mxu0 0.0
      %1124 = vmatpush1.msra.mxu0 0.0
      %1125 = vmatprep.subr.mxu0 0.0
      %1126 = vmatpush1.msra.mxu0 0.0
      %1127 = vmatprep.subr.mxu0 0.0
      %1128 = vmatpush1.msra.mxu0 0.0
      %1129 = vmatprep.subr.mxu0 0.0
      %1130 = vmatpush1.msra.mxu0 0.0
      %1131 = vmatprep.subr.mxu0 0.0
      %1132 = vmatpush1.msra.mxu0 0.0
      %1133 = vmatprep.subr.mxu0 0.0
      %1134 = vmatpush1.msra.mxu0 0.0
      %1135 = vmatprep.subr.mxu0 0.0
      %1136 = vmatpush1.msra.mxu0 0.0
      %1137 = vmatprep.subr.mxu0 0.0
      %1138 = vmatpush1.msra.mxu0 0.0
      %1139 = vmatprep.subr.mxu0 0.0
      %1140 = vmatpush1.msra.mxu0 0.0
      %1141 = vmatprep.subr.mxu0 0.0
      %1142 = vmatpush1.msra.mxu0 0.0
      %1143 = vmatprep.subr.mxu0 0.0
      %1144 = vmatpush1.msra.mxu0 0.0
      %1145 = vmatprep.subr.mxu0 0.0
      %1146 = vmatpush1.msra.mxu0 0.0
      %1147 = vmatprep.subr.mxu0 0.0
      %1148 = vmatpush1.msra.mxu0 0.0
      %1149 = vmatprep.subr.mxu0 0.0
      %1150 = vmatpush1.msra.mxu0 0.0
      %1151 = vmatprep.subr.mxu0 0.0
      %1152 = vmatpush1.msra.mxu0 0.0
      %1153 = vmatprep.subr.mxu0 0.0
      %1154 = vmatpush1.msra.mxu0 0.0
      %1155 = vmatprep.subr.mxu0 0.0
      %1156 = vmatpush1.msra.mxu0 0.0
      %1157 = vmatprep.subr.mxu0 0.0
      %1158 = vmatpush1.msra.mxu0 0.0
      %1159 = vmatprep.subr.mxu0 0.0
      %1160 = vmatpush1.msra.mxu0 0.0
      %1161 = vmatprep.subr.mxu0 0.0
      %1162 = vmatpush1.msra.mxu0 0.0
      %1163 = vmatprep.subr.mxu0 0.0
      %1164 = vmatpush1.msra.mxu0 0.0
      %1165 = vmatprep.subr.mxu0 0.0
      %1166 = vmatpush1.msra.mxu0 0.0
      %1167 = vmatprep.subr.mxu0 0.0
      %1168 = vmatpush1.msra.mxu0 0.0
      %1169 = vmatprep.subr.mxu0 0.0
      %1170 = vmatpush1.msra.mxu0 0.0
      %1171 = vmatprep.subr.mxu0 0.0
      %1172 = vmatpush1.msra.mxu0 0.0
      %1173 = vmatprep.mubr.f32.mxu0 0.0
      %1174 = vmatmul.mubr.f32.gmra.mrb[0].mxu0 %v845
      %v1175 = vpop.f32.mrb[0].mxu0
      %v1176 = vadd.f32 0.0, %v1175
      %v1177 = vpop.f32.mrb[0].mxu0
      %1178 = vmatprep.mubr.f32.mxu0 0.0
      %1179 = vmatmul.mubr.f32.gmra.mrb[0].mxu0 %v848
      %v1180 = vpop.f32.mrb[0].mxu0
      %v1181 = vadd.f32 0.0, %v1180
      %v1182 = vpop.f32.mrb[0].mxu0
      %1183 = vdwg.mxu0
      %v1184 = vadd.f32 %v1099, %v1101
      %v1185 = vsel %vm439, %v1176, 0.0
      %v1186 = vadd.f32 %v1184, %v1185
      %1187 = vadd.xlane.f32.xlu0 %v1186
      %v1188 = vpop.xlane.xlu0 %1187
      %v1189 = vadd.f32 %v1105, %v1107
      %v1190 = vsel %vm439, %v1181, 0.0
      %v1191 = vadd.f32 %v1189, %v1190
      %1192 = vadd.xlane.f32.xlu0 %v1191
      %v1193 = vpop.xlane.xlu0 %1192
      %v1194 = vmul.f32 %v1188, 0.001953125
      %v1195 = vmul.f32 %v1193, 0.001953125
      %v1196 = vadd.f32 %v1194, 1e-05
      %v1197 = vadd.f32 %v1195, 1e-05
      %v1198 = vrsqrt.pop %v1196
      %v1199 = vrsqrt.pop %v1197
      %v1200 = vmul.f32 %v1014, %v1198
      %v1201 = vmul.f32 %v1015, %v1198
      %v1202 = vmul.f32 %v1016, %v1198
      %v1203 = vmul.f32 %v1017, %v1199
      %v1204 = vmul.f32 %v1018, %v1199
      %v1205 = vmul.f32 %v1019, %v1199
      %1207 = vset.pattern.permute.xlu0 0
      %1208 = vperm.xlu0 %1207, %v809
      %v1209 = vpop.permute.xlu0 %1208
      %1212 = vset.pattern.permute.xlu0 0
      %1213 = vperm.xlu0 %1212, %v810
      %v1214 = vpop.permute.xlu0 %1213
      %v1216 = vmul.f32 %v1200, %v1209
      %v1217 = vmul.f32 %v1201, %v1209
      %v1218 = vmul.f32 %v1202, %v1209
      %v1219 = vmul.f32 %v1203, %v1214
      %v1220 = vmul.f32 %v1204, %v1214
      %v1221 = vmul.f32 %v1205, %v1214
      %1223 = vset.pattern.permute.xlu0 0
      %1224 = vperm.xlu0 %1223, %v811
      %v1225 = vpop.permute.xlu0 %1224
      %1228 = vset.pattern.permute.xlu0 0
      %1229 = vperm.xlu0 %1228, %v812
      %v1230 = vpop.permute.xlu0 %1229
      %v1232 = vadd.f32 %v1216, %v1225
      %v1233 = vadd.f32 %v1217, %v1225
      %v1234 = vadd.f32 %v1218, %v1225
      %v1235 = vadd.f32 %v1219, %v1230
      %v1236 = vadd.f32 %v1220, %v1230
      %v1237 = vadd.f32 %v1221, %v1230
      %v1238 = vxor.u32 %v1232, 2147483648
      %v1239 = vxor.u32 %v1233, 2147483648
      %v1240 = vxor.u32 %v1234, 2147483648
      %v1241 = vxor.u32 %v1235, 2147483648
      %v1242 = vxor.u32 %v1236, 2147483648
      %v1243 = vxor.u32 %v1237, 2147483648
      %v1244 = vmul.f32 %v1238, 1.442695
      %v1245 = vpow.pop %v1244
      %v1246 = vmul.f32 %v1239, 1.442695
      %v1247 = vpow.pop %v1246
      %v1248 = vmul.f32 %v1240, 1.442695
      %v1249 = vpow.pop %v1248
      %v1250 = vmul.f32 %v1241, 1.442695
      %v1251 = vpow.pop %v1250
      %v1252 = vmul.f32 %v1242, 1.442695
      %v1253 = vpow.pop %v1252
      %v1254 = vmul.f32 %v1243, 1.442695
      %v1255 = vpow.pop %v1254
      %v1256 = vadd.f32 %v1245, 1.0
      %v1257 = vadd.f32 %v1247, 1.0
      %v1258 = vadd.f32 %v1249, 1.0
      %v1259 = vadd.f32 %v1251, 1.0
      %v1260 = vadd.f32 %v1253, 1.0
      %v1261 = vadd.f32 %v1255, 1.0
      %v1262 = vrcp.pop %v1256
      %v1263 = vmul.f32 1.0, %v1262
      %v1264 = vrcp.pop %v1257
      %v1265 = vmul.f32 1.0, %v1264
      %v1266 = vrcp.pop %v1258
      %v1267 = vmul.f32 1.0, %v1266
      %v1268 = vrcp.pop %v1259
      %v1269 = vmul.f32 1.0, %v1268
      %v1270 = vrcp.pop %v1260
      %v1271 = vmul.f32 1.0, %v1270
      %v1272 = vrcp.pop %v1261
      %v1273 = vmul.f32 1.0, %v1272
      %v1274 = vmul.f32 %v1232, %v1263
      %v1275 = vmul.f32 %v1233, %v1265
      %v1276 = vmul.f32 %v1234, %v1267
      %v1277 = vmul.f32 %v1235, %v1269
      %v1278 = vmul.f32 %v1236, %v1271
      %v1279 = vmul.f32 %v1237, %v1273
      %1280 = vst [vmem:[#allocation3] sm:$0xff] 0.0
      %1281 = vst [vmem:[#allocation3 + $0x8] sm:$0xff] 0.0
      %vm1282 = vcmask 572416
      %1283 = vst.msk [vmem:[#allocation3 + $0x10] sm:$0xff] %vm1282, 0.0
      %1284 = vst [vmem:[#allocation3 + $0x18] sm:$0xff] 0.0
      %1285 = vst [vmem:[#allocation3 + $0x20] sm:$0xff] 0.0
      %1286 = vst.msk [vmem:[#allocation3 + $0x28] sm:$0xff] %vm1282, 0.0
      %1287 = vst [vmem:[#allocation3 + $0x30] sm:$0xff] 0.0
      %1288 = vst [vmem:[#allocation3 + $0x38] sm:$0xff] 0.0
      %1289 = vst.msk [vmem:[#allocation3 + $0x40] sm:$0xff] %vm1282, 0.0
      %v1290 = vmul.f32 %v1274, %v832
      %v1291 = vmul.f32 %v1275, %v833
      %v1292 = vmul.f32 %v1276, %v831
      %v1293 = vmul.f32 %v1277, %v832
      %v1294 = vmul.f32 %v1278, %v833
      %v1295 = vmul.f32 %v1279, %v831
      %1302 = vrot.lane.b32.xlu0 %v1290, 19
      %v1303 = vpop.permute.xlu0 %1302
      %1304 = vrot.lane.b32.xlu0 %v1291, 19
      %v1305 = vpop.permute.xlu0 %1304
      %1306 = vrot.lane.b32.xlu0 %v1292, 19
      %v1307 = vpop.permute.xlu0 %1306
      %1308 = vrot.lane.b32.xlu0 %v1293, 19
      %v1309 = vpop.permute.xlu0 %1308
      %1310 = vrot.lane.b32.xlu0 %v1294, 19
      %v1311 = vpop.permute.xlu0 %1310
      %1312 = vrot.lane.b32.xlu0 %v1295, 19
      %v1313 = vpop.permute.xlu0 %1312
      %vm1314 = vcmask 154624
      %v1315 = vsel %vm1314, %v1303, %v1305
      %v1316 = vsel %vm1314, %v1305, %v1307
      %v1317 = vsel %vm1314, %v1309, %v1311
      %v1318 = vsel %vm1314, %v1311, %v1313
      %vm1325 = vcmask 1047704
      %1326 = vst.msk [vmem:[#allocation3] sm:$0xff] %vm1325, %v1303
      %1327 = vst [vmem:[#allocation3 + $0x8] sm:$0xff] %v1315
      %vm1328 = vcmask 416768
      %1329 = vst.msk [vmem:[#allocation3 + $0x10] sm:$0xff] %vm1328, %v1316
      %1330 = vst.msk [vmem:[#allocation3 + $0x18] sm:$0xff] %vm1325, %v1309
      %1331 = vst [vmem:[#allocation3 + $0x20] sm:$0xff] %v1317
      %1332 = vst.msk [vmem:[#allocation3 + $0x28] sm:$0xff] %vm1328, %v1318
      %v1333 = vld [vmem:[%s425] sm:$0xff]
      %1335 = vset.pattern.permute.xlu0 0
      %1336 = vperm.xlu0 %1335, %v1333
      %v1337 = vpop.permute.xlu0 %1336
      %v1342 = vmul.f32 %v1337, %v817
      %v1343 = vmul.f32 %v1337, %v821
      %v1344 = vmul.f32 %v1337, %v825
      %1345 = vst [vmem:[#allocation3 + $0x30] sm:$0xff] %v1342
      %1346 = vst [vmem:[#allocation3 + $0x38] sm:$0xff] %v1343
      %1347 = vst.msk [vmem:[#allocation3 + $0x40] sm:$0xff] %vm1282, %v1344
      %v1348 = vld [vmem:[#allocation3] sm:$0xff]
      %v1349 = vld [vmem:[#allocation3 + $0x8] sm:$0xff]
      %v1350 = vld [vmem:[#allocation3 + $0x10] sm:$0xff]
      %v1351 = vld [vmem:[#allocation3 + $0x18] sm:$0xff]
      %v1352 = vld [vmem:[#allocation3 + $0x20] sm:$0xff]
      %v1353 = vld [vmem:[#allocation3 + $0x28] sm:$0xff]
      %v1354 = vld [vmem:[#allocation3 + $0x30] sm:$0xff]
      %v1355 = vld [vmem:[#allocation3 + $0x38] sm:$0xff]
      %v1356 = vld [vmem:[#allocation3 + $0x40] sm:$0xff]
      %1357 = vst [vmem:[#allocation4] sm:$0xff] %v1348
      %1358 = vst [vmem:[#allocation4 + $0x8] sm:$0xff] %v1349
      %1359 = vst.msk [vmem:[#allocation4 + $0x10] sm:$0xff] %vm439, %v1350
      %1360 = vst [vmem:[#allocation4 + $0x18] sm:$0xff] %v1351
      %1361 = vst [vmem:[#allocation4 + $0x20] sm:$0xff] %v1352
      %1362 = vst.msk [vmem:[#allocation4 + $0x28] sm:$0xff] %vm439, %v1353
      %1363 = vst [vmem:[#allocation4 + $0x30] sm:$0xff] %v1354
      %1364 = vst [vmem:[#allocation4 + $0x38] sm:$0xff] %v1355
      %1365 = vst.msk [vmem:[#allocation4 + $0x40] sm:$0xff] %vm439, %v1356
      %v1366 = vld [vmem:[#allocation3] sm:$0xff]
      %v1367 = vld [vmem:[#allocation3 + $0x8] sm:$0xff]
      %v1368 = vld [vmem:[#allocation3 + $0x10] sm:$0xff]
      %v1369 = vld [vmem:[#allocation3 + $0x18] sm:$0xff]
      %v1370 = vld [vmem:[#allocation3 + $0x20] sm:$0xff]
      %v1371 = vld [vmem:[#allocation3 + $0x28] sm:$0xff]
      %v1372 = vld [vmem:[#allocation3 + $0x30] sm:$0xff]
      %v1373 = vld [vmem:[#allocation3 + $0x38] sm:$0xff]
      %v1374 = vld [vmem:[#allocation3 + $0x40] sm:$0xff]
      %1384 = vrot.lane.b32.xlu0 %v1366, 127
      %v1385 = vpop.permute.xlu0 %1384
      %1386 = vrot.lane.b32.xlu0 %v1367, 127
      %v1387 = vpop.permute.xlu0 %1386
      %1388 = vrot.lane.b32.xlu0 %v1368, 127
      %v1389 = vpop.permute.xlu0 %1388
      %1390 = vrot.lane.b32.xlu0 %v1369, 127
      %v1391 = vpop.permute.xlu0 %1390
      %1392 = vrot.lane.b32.xlu0 %v1370, 127
      %v1393 = vpop.permute.xlu0 %1392
      %1394 = vrot.lane.b32.xlu0 %v1371, 127
      %v1395 = vpop.permute.xlu0 %1394
      %1396 = vrot.lane.b32.xlu0 %v1372, 127
      %v1397 = vpop.permute.xlu0 %1396
      %1398 = vrot.lane.b32.xlu0 %v1373, 127
      %v1399 = vpop.permute.xlu0 %1398
      %1400 = vrot.lane.b32.xlu0 %v1374, 127
      %v1401 = vpop.permute.xlu0 %1400
      %v1402 = vsel %vm453, %v1385, %v1387
      %v1403 = vsel %vm453, %v1387, %v1389
      %v1404 = vsel %vm453, %v1391, %v1393
      %v1405 = vsel %vm453, %v1393, %v1395
      %v1406 = vsel %vm453, %v1397, %v1399
      %v1407 = vsel %vm453, %v1399, %v1401
      %1417 = vst [vmem:[#allocation4 + $0x48] sm:$0xff] %v1402
      %1418 = vst [vmem:[#allocation4 + $0x50] sm:$0xff] %v1403
      %1419 = vst.msk [vmem:[#allocation4 + $0x58] sm:$0xff] %vm439, %v1389
      %1420 = vst [vmem:[#allocation4 + $0x60] sm:$0xff] %v1404
      %1421 = vst [vmem:[#allocation4 + $0x68] sm:$0xff] %v1405
      %1422 = vst.msk [vmem:[#allocation4 + $0x70] sm:$0xff] %vm439, %v1395
      %1423 = vst [vmem:[#allocation4 + $0x78] sm:$0xff] %v1406
      %1424 = vst [vmem:[#allocation4 + $0x80] sm:$0xff] %v1407
      %1425 = vst.msk [vmem:[#allocation4 + $0x88] sm:$0xff] %vm439, %v1401
      %v1426 = vld [vmem:[#allocation3] sm:$0xff]
      %v1427 = vld [vmem:[#allocation3 + $0x8] sm:$0xff]
      %v1428 = vld [vmem:[#allocation3 + $0x10] sm:$0xff]
      %v1429 = vld [vmem:[#allocation3 + $0x18] sm:$0xff]
      %v1430 = vld [vmem:[#allocation3 + $0x20] sm:$0xff]
      %v1431 = vld [vmem:[#allocation3 + $0x28] sm:$0xff]
      %v1432 = vld [vmem:[#allocation3 + $0x30] sm:$0xff]
      %v1433 = vld [vmem:[#allocation3 + $0x38] sm:$0xff]
      %v1434 = vld [vmem:[#allocation3 + $0x40] sm:$0xff]
      %1444 = vrot.lane.b32.xlu0 %v1426, 126
      %v1445 = vpop.permute.xlu0 %1444
      %1446 = vrot.lane.b32.xlu0 %v1427, 126
      %v1447 = vpop.permute.xlu0 %1446
      %1448 = vrot.lane.b32.xlu0 %v1428, 126
      %v1449 = vpop.permute.xlu0 %1448
      %1450 = vrot.lane.b32.xlu0 %v1429, 126
      %v1451 = vpop.permute.xlu0 %1450
      %1452 = vrot.lane.b32.xlu0 %v1430, 126
      %v1453 = vpop.permute.xlu0 %1452
      %1454 = vrot.lane.b32.xlu0 %v1431, 126
      %v1455 = vpop.permute.xlu0 %1454
      %1456 = vrot.lane.b32.xlu0 %v1432, 126
      %v1457 = vpop.permute.xlu0 %1456
      %1458 = vrot.lane.b32.xlu0 %v1433, 126
      %v1459 = vpop.permute.xlu0 %1458
      %1460 = vrot.lane.b32.xlu0 %v1434, 126
      %v1461 = vpop.permute.xlu0 %1460
      %v1462 = vsel %vm474, %v1445, %v1447
      %v1463 = vsel %vm474, %v1447, %v1449
      %v1464 = vsel %vm474, %v1451, %v1453
      %v1465 = vsel %vm474, %v1453, %v1455
      %v1466 = vsel %vm474, %v1457, %v1459
      %v1467 = vsel %vm474, %v1459, %v1461
      %1477 = vst [vmem:[#allocation4 + $0x90] sm:$0xff] %v1462
      %1478 = vst [vmem:[#allocation4 + $0x98] sm:$0xff] %v1463
      %1479 = vst.msk [vmem:[#allocation4 + $0xa0] sm:$0xff] %vm439, %v1449
      %1480 = vst [vmem:[#allocation4 + $0xa8] sm:$0xff] %v1464
      %1481 = vst [vmem:[#allocation4 + $0xb0] sm:$0xff] %v1465
      %1482 = vst.msk [vmem:[#allocation4 + $0xb8] sm:$0xff] %vm439, %v1455
      %1483 = vst [vmem:[#allocation4 + $0xc0] sm:$0xff] %v1466
      %1484 = vst [vmem:[#allocation4 + $0xc8] sm:$0xff] %v1467
      %1485 = vst.msk [vmem:[#allocation4 + $0xd0] sm:$0xff] %vm439, %v1461
      %v1486 = vld [vmem:[#allocation3] sm:$0xff]
      %v1487 = vld [vmem:[#allocation3 + $0x8] sm:$0xff]
      %v1488 = vld [vmem:[#allocation3 + $0x10] sm:$0xff]
      %v1489 = vld [vmem:[#allocation3 + $0x18] sm:$0xff]
      %v1490 = vld [vmem:[#allocation3 + $0x20] sm:$0xff]
      %v1491 = vld [vmem:[#allocation3 + $0x28] sm:$0xff]
      %v1492 = vld [vmem:[#allocation3 + $0x30] sm:$0xff]
      %v1493 = vld [vmem:[#allocation3 + $0x38] sm:$0xff]
      %v1494 = vld [vmem:[#allocation3 + $0x40] sm:$0xff]
      %1504 = vrot.lane.b32.xlu0 %v1486, 110
      %v1505 = vpop.permute.xlu0 %1504
      %1506 = vrot.lane.b32.xlu0 %v1487, 110
      %v1507 = vpop.permute.xlu0 %1506
      %1508 = vrot.lane.b32.xlu0 %v1488, 110
      %v1509 = vpop.permute.xlu0 %1508
      %1510 = vrot.lane.b32.xlu0 %v1489, 110
      %v1511 = vpop.permute.xlu0 %1510
      %1512 = vrot.lane.b32.xlu0 %v1490, 110
      %v1513 = vpop.permute.xlu0 %1512
      %1514 = vrot.lane.b32.xlu0 %v1491, 110
      %v1515 = vpop.permute.xlu0 %1514
      %1516 = vrot.lane.b32.xlu0 %v1492, 110
      %v1517 = vpop.permute.xlu0 %1516
      %1518 = vrot.lane.b32.xlu0 %v1493, 110
      %v1519 = vpop.permute.xlu0 %1518
      %1520 = vrot.lane.b32.xlu0 %v1494, 110
      %v1521 = vpop.permute.xlu0 %1520
      %v1522 = vsel %vm495, %v1505, %v1507
      %v1523 = vsel %vm495, %v1507, %v1509
      %v1524 = vsel %vm495, %v1511, %v1513
      %v1525 = vsel %vm495, %v1513, %v1515
      %v1526 = vsel %vm495, %v1517, %v1519
      %v1527 = vsel %vm495, %v1519, %v1521
      %1537 = vst [vmem:[#allocation4 + $0xd8] sm:$0xff] %v1522
      %1538 = vst [vmem:[#allocation4 + $0xe0] sm:$0xff] %v1523
      %1539 = vst.msk [vmem:[#allocation4 + $0xe8] sm:$0xff] %vm439, %v1509
      %1540 = vst [vmem:[#allocation4 + $0xf0] sm:$0xff] %v1524
      %1541 = vst [vmem:[#allocation4 + $0xf8] sm:$0xff] %v1525
      %1542 = vst.msk [vmem:[#allocation4 + $0x100] sm:$0xff] %vm439, %v1515
      %1543 = vst [vmem:[#allocation4 + $0x108] sm:$0xff] %v1526
      %1544 = vst [vmem:[#allocation4 + $0x110] sm:$0xff] %v1527
      %1545 = vst.msk [vmem:[#allocation4 + $0x118] sm:$0xff] %vm439, %v1521
      %v1546 = vld [vmem:[#allocation3] sm:$0xff]
      %v1547 = vld [vmem:[#allocation3 + $0x8] sm:$0xff]
      %v1548 = vld [vmem:[#allocation3 + $0x10] sm:$0xff]
      %v1549 = vld [vmem:[#allocation3 + $0x18] sm:$0xff]
      %v1550 = vld [vmem:[#allocation3 + $0x20] sm:$0xff]
      %v1551 = vld [vmem:[#allocation3 + $0x28] sm:$0xff]
      %v1552 = vld [vmem:[#allocation3 + $0x30] sm:$0xff]
      %v1553 = vld [vmem:[#allocation3 + $0x38] sm:$0xff]
      %v1554 = vld [vmem:[#allocation3 + $0x40] sm:$0xff]
      %1564 = vrot.lane.b32.xlu0 %v1546, 109
      %v1565 = vpop.permute.xlu0 %1564
      %1566 = vrot.lane.b32.xlu0 %v1547, 109
      %v1567 = vpop.permute.xlu0 %1566
      %1568 = vrot.lane.b32.xlu0 %v1548, 109
      %v1569 = vpop.permute.xlu0 %1568
      %1570 = vrot.lane.b32.xlu0 %v1549, 109
      %v1571 = vpop.permute.xlu0 %1570
      %1572 = vrot.lane.b32.xlu0 %v1550, 109
      %v1573 = vpop.permute.xlu0 %1572
      %1574 = vrot.lane.b32.xlu0 %v1551, 109
      %v1575 = vpop.permute.xlu0 %1574
      %1576 = vrot.lane.b32.xlu0 %v1552, 109
      %v1577 = vpop.permute.xlu0 %1576
      %1578 = vrot.lane.b32.xlu0 %v1553, 109
      %v1579 = vpop.permute.xlu0 %1578
      %1580 = vrot.lane.b32.xlu0 %v1554, 109
      %v1581 = vpop.permute.xlu0 %1580
      %v1582 = vsel %vm516, %v1565, %v1567
      %v1583 = vsel %vm516, %v1567, %v1569
      %v1584 = vsel %vm516, %v1571, %v1573
      %v1585 = vsel %vm516, %v1573, %v1575
      %v1586 = vsel %vm516, %v1577, %v1579
      %v1587 = vsel %vm516, %v1579, %v1581
      %1597 = vst [vmem:[#allocation4 + $0x120] sm:$0xff] %v1582
      %1598 = vst [vmem:[#allocation4 + $0x128] sm:$0xff] %v1583
      %1599 = vst.msk [vmem:[#allocation4 + $0x130] sm:$0xff] %vm439, %v1569
      %1600 = vst [vmem:[#allocation4 + $0x138] sm:$0xff] %v1584
      %1601 = vst [vmem:[#allocation4 + $0x140] sm:$0xff] %v1585
      %1602 = vst.msk [vmem:[#allocation4 + $0x148] sm:$0xff] %vm439, %v1575
      %1603 = vst [vmem:[#allocation4 + $0x150] sm:$0xff] %v1586
      %1604 = vst [vmem:[#allocation4 + $0x158] sm:$0xff] %v1587
      %1605 = vst.msk [vmem:[#allocation4 + $0x160] sm:$0xff] %vm439, %v1581
      %v1606 = vld [vmem:[#allocation3] sm:$0xff]
      %v1607 = vld [vmem:[#allocation3 + $0x8] sm:$0xff]
      %v1608 = vld [vmem:[#allocation3 + $0x10] sm:$0xff]
      %v1609 = vld [vmem:[#allocation3 + $0x18] sm:$0xff]
      %v1610 = vld [vmem:[#allocation3 + $0x20] sm:$0xff]
      %v1611 = vld [vmem:[#allocation3 + $0x28] sm:$0xff]
      %v1612 = vld [vmem:[#allocation3 + $0x30] sm:$0xff]
      %v1613 = vld [vmem:[#allocation3 + $0x38] sm:$0xff]
      %v1614 = vld [vmem:[#allocation3 + $0x40] sm:$0xff]
      %1624 = vrot.lane.b32.xlu0 %v1606, 108
      %v1625 = vpop.permute.xlu0 %1624
      %1626 = vrot.lane.b32.xlu0 %v1607, 108
      %v1627 = vpop.permute.xlu0 %1626
      %1628 = vrot.lane.b32.xlu0 %v1608, 108
      %v1629 = vpop.permute.xlu0 %1628
      %1630 = vrot.lane.b32.xlu0 %v1609, 108
      %v1631 = vpop.permute.xlu0 %1630
      %1632 = vrot.lane.b32.xlu0 %v1610, 108
      %v1633 = vpop.permute.xlu0 %1632
      %1634 = vrot.lane.b32.xlu0 %v1611, 108
      %v1635 = vpop.permute.xlu0 %1634
      %1636 = vrot.lane.b32.xlu0 %v1612, 108
      %v1637 = vpop.permute.xlu0 %1636
      %1638 = vrot.lane.b32.xlu0 %v1613, 108
      %v1639 = vpop.permute.xlu0 %1638
      %1640 = vrot.lane.b32.xlu0 %v1614, 108
      %v1641 = vpop.permute.xlu0 %1640
      %v1642 = vsel %vm537, %v1625, %v1627
      %v1643 = vsel %vm537, %v1627, %v1629
      %v1644 = vsel %vm537, %v1631, %v1633
      %v1645 = vsel %vm537, %v1633, %v1635
      %v1646 = vsel %vm537, %v1637, %v1639
      %v1647 = vsel %vm537, %v1639, %v1641
      %1657 = vst [vmem:[#allocation4 + $0x168] sm:$0xff] %v1642
      %1658 = vst [vmem:[#allocation4 + $0x170] sm:$0xff] %v1643
      %1659 = vst.msk [vmem:[#allocation4 + $0x178] sm:$0xff] %vm439, %v1629
      %1660 = vst [vmem:[#allocation4 + $0x180] sm:$0xff] %v1644
      %1661 = vst [vmem:[#allocation4 + $0x188] sm:$0xff] %v1645
      %1662 = vst.msk [vmem:[#allocation4 + $0x190] sm:$0xff] %vm439, %v1635
      %1663 = vst [vmem:[#allocation4 + $0x198] sm:$0xff] %v1646
      %1664 = vst [vmem:[#allocation4 + $0x1a0] sm:$0xff] %v1647
      %1665 = vst.msk [vmem:[#allocation4 + $0x1a8] sm:$0xff] %vm439, %v1641
      %v1666 = vld [vmem:[#allocation3] sm:$0xff]
      %v1667 = vld [vmem:[#allocation3 + $0x8] sm:$0xff]
      %v1668 = vld [vmem:[#allocation3 + $0x10] sm:$0xff]
      %v1669 = vld [vmem:[#allocation3 + $0x18] sm:$0xff]
      %v1670 = vld [vmem:[#allocation3 + $0x20] sm:$0xff]
      %v1671 = vld [vmem:[#allocation3 + $0x28] sm:$0xff]
      %v1672 = vld [vmem:[#allocation3 + $0x30] sm:$0xff]
      %v1673 = vld [vmem:[#allocation3 + $0x38] sm:$0xff]
      %v1674 = vld [vmem:[#allocation3 + $0x40] sm:$0xff]
      %1684 = vrot.lane.b32.xlu0 %v1666, 92
      %v1685 = vpop.permute.xlu0 %1684
      %1686 = vrot.lane.b32.xlu0 %v1667, 92
      %v1687 = vpop.permute.xlu0 %1686
      %1688 = vrot.lane.b32.xlu0 %v1668, 92
      %v1689 = vpop.permute.xlu0 %1688
      %1690 = vrot.lane.b32.xlu0 %v1669, 92
      %v1691 = vpop.permute.xlu0 %1690
      %1692 = vrot.lane.b32.xlu0 %v1670, 92
      %v1693 = vpop.permute.xlu0 %1692
      %1694 = vrot.lane.b32.xlu0 %v1671, 92
      %v1695 = vpop.permute.xlu0 %1694
      %1696 = vrot.lane.b32.xlu0 %v1672, 92
      %v1697 = vpop.permute.xlu0 %1696
      %1698 = vrot.lane.b32.xlu0 %v1673, 92
      %v1699 = vpop.permute.xlu0 %1698
      %1700 = vrot.lane.b32.xlu0 %v1674, 92
      %v1701 = vpop.permute.xlu0 %1700
      %v1702 = vsel %vm558, %v1685, %v1687
      %v1703 = vsel %vm558, %v1687, %v1689
      %v1704 = vsel %vm558, %v1691, %v1693
      %v1705 = vsel %vm558, %v1693, %v1695
      %v1706 = vsel %vm558, %v1697, %v1699
      %v1707 = vsel %vm558, %v1699, %v1701
      %1717 = vst [vmem:[#allocation4 + $0x1b0] sm:$0xff] %v1702
      %1718 = vst [vmem:[#allocation4 + $0x1b8] sm:$0xff] %v1703
      %1719 = vst.msk [vmem:[#allocation4 + $0x1c0] sm:$0xff] %vm439, %v1689
      %1720 = vst [vmem:[#allocation4 + $0x1c8] sm:$0xff] %v1704
      %1721 = vst [vmem:[#allocation4 + $0x1d0] sm:$0xff] %v1705
      %1722 = vst.msk [vmem:[#allocation4 + $0x1d8] sm:$0xff] %vm439, %v1695
      %1723 = vst [vmem:[#allocation4 + $0x1e0] sm:$0xff] %v1706
      %1724 = vst [vmem:[#allocation4 + $0x1e8] sm:$0xff] %v1707
      %1725 = vst.msk [vmem:[#allocation4 + $0x1f0] sm:$0xff] %vm439, %v1701
      %v1726 = vld [vmem:[#allocation3] sm:$0xff]
      %v1727 = vld [vmem:[#allocation3 + $0x8] sm:$0xff]
      %v1728 = vld [vmem:[#allocation3 + $0x10] sm:$0xff]
      %v1729 = vld [vmem:[#allocation3 + $0x18] sm:$0xff]
      %v1730 = vld [vmem:[#allocation3 + $0x20] sm:$0xff]
      %v1731 = vld [vmem:[#allocation3 + $0x28] sm:$0xff]
      %v1732 = vld [vmem:[#allocation3 + $0x30] sm:$0xff]
      %v1733 = vld [vmem:[#allocation3 + $0x38] sm:$0xff]
      %v1734 = vld [vmem:[#allocation3 + $0x40] sm:$0xff]
      %1744 = vrot.lane.b32.xlu0 %v1726, 91
      %v1745 = vpop.permute.xlu0 %1744
      %1746 = vrot.lane.b32.xlu0 %v1727, 91
      %v1747 = vpop.permute.xlu0 %1746
      %1748 = vrot.lane.b32.xlu0 %v1728, 91
      %v1749 = vpop.permute.xlu0 %1748
      %1750 = vrot.lane.b32.xlu0 %v1729, 91
      %v1751 = vpop.permute.xlu0 %1750
      %1752 = vrot.lane.b32.xlu0 %v1730, 91
      %v1753 = vpop.permute.xlu0 %1752
      %1754 = vrot.lane.b32.xlu0 %v1731, 91
      %v1755 = vpop.permute.xlu0 %1754
      %1756 = vrot.lane.b32.xlu0 %v1732, 91
      %v1757 = vpop.permute.xlu0 %1756
      %1758 = vrot.lane.b32.xlu0 %v1733, 91
      %v1759 = vpop.permute.xlu0 %1758
      %1760 = vrot.lane.b32.xlu0 %v1734, 91
      %v1761 = vpop.permute.xlu0 %1760
      %v1762 = vsel %vm579, %v1745, %v1747
      %v1763 = vsel %vm579, %v1747, %v1749
      %v1764 = vsel %vm579, %v1751, %v1753
      %v1765 = vsel %vm579, %v1753, %v1755
      %v1766 = vsel %vm579, %v1757, %v1759
      %v1767 = vsel %vm579, %v1759, %v1761
      %1777 = vst [vmem:[#allocation4 + $0x1f8] sm:$0xff] %v1762
      %1778 = vst [vmem:[#allocation4 + $0x200] sm:$0xff] %v1763
      %1779 = vst.msk [vmem:[#allocation4 + $0x208] sm:$0xff] %vm439, %v1749
      %1780 = vst [vmem:[#allocation4 + $0x210] sm:$0xff] %v1764
      %1781 = vst [vmem:[#allocation4 + $0x218] sm:$0xff] %v1765
      %1782 = vst.msk [vmem:[#allocation4 + $0x220] sm:$0xff] %vm439, %v1755
      %1783 = vst [vmem:[#allocation4 + $0x228] sm:$0xff] %v1766
      %1784 = vst [vmem:[#allocation4 + $0x230] sm:$0xff] %v1767
      %1785 = vst.msk [vmem:[#allocation4 + $0x238] sm:$0xff] %vm439, %v1761
      %v1786 = vld [vmem:[#allocation3] sm:$0xff]
      %v1787 = vld [vmem:[#allocation3 + $0x8] sm:$0xff]
      %v1788 = vld [vmem:[#allocation3 + $0x10] sm:$0xff]
      %v1789 = vld [vmem:[#allocation3 + $0x18] sm:$0xff]
      %v1790 = vld [vmem:[#allocation3 + $0x20] sm:$0xff]
      %v1791 = vld [vmem:[#allocation3 + $0x28] sm:$0xff]
      %v1792 = vld [vmem:[#allocation3 + $0x30] sm:$0xff]
      %v1793 = vld [vmem:[#allocation3 + $0x38] sm:$0xff]
      %v1794 = vld [vmem:[#allocation3 + $0x40] sm:$0xff]
      %1804 = vrot.lane.b32.xlu0 %v1786, 90
      %v1805 = vpop.permute.xlu0 %1804
      %1806 = vrot.lane.b32.xlu0 %v1787, 90
      %v1807 = vpop.permute.xlu0 %1806
      %1808 = vrot.lane.b32.xlu0 %v1788, 90
      %v1809 = vpop.permute.xlu0 %1808
      %1810 = vrot.lane.b32.xlu0 %v1789, 90
      %v1811 = vpop.permute.xlu0 %1810
      %1812 = vrot.lane.b32.xlu0 %v1790, 90
      %v1813 = vpop.permute.xlu0 %1812
      %1814 = vrot.lane.b32.xlu0 %v1791, 90
      %v1815 = vpop.permute.xlu0 %1814
      %1816 = vrot.lane.b32.xlu0 %v1792, 90
      %v1817 = vpop.permute.xlu0 %1816
      %1818 = vrot.lane.b32.xlu0 %v1793, 90
      %v1819 = vpop.permute.xlu0 %1818
      %1820 = vrot.lane.b32.xlu0 %v1794, 90
      %v1821 = vpop.permute.xlu0 %1820
      %v1822 = vsel %vm600, %v1805, %v1807
      %v1823 = vsel %vm600, %v1807, %v1809
      %v1824 = vsel %vm600, %v1811, %v1813
      %v1825 = vsel %vm600, %v1813, %v1815
      %v1826 = vsel %vm600, %v1817, %v1819
      %v1827 = vsel %vm600, %v1819, %v1821
      %1837 = vst [vmem:[#allocation4 + $0x240] sm:$0xff] %v1822
      %1838 = vst [vmem:[#allocation4 + $0x248] sm:$0xff] %v1823
      %1839 = vst.msk [vmem:[#allocation4 + $0x250] sm:$0xff] %vm439, %v1809
      %1840 = vst [vmem:[#allocation4 + $0x258] sm:$0xff] %v1824
      %1841 = vst [vmem:[#allocation4 + $0x260] sm:$0xff] %v1825
      %1842 = vst.msk [vmem:[#allocation4 + $0x268] sm:$0xff] %vm439, %v1815
      %1843 = vst [vmem:[#allocation4 + $0x270] sm:$0xff] %v1826
      %1844 = vst [vmem:[#allocation4 + $0x278] sm:$0xff] %v1827
      %1845 = vst.msk [vmem:[#allocation4 + $0x280] sm:$0xff] %vm439, %v1821
      %v1846 = vld [vmem:[%s7] sm:$0xff]
      %v1847 = vld [vmem:[%s7 + $0x8] sm:$0xff]
      %v1848 = vld [vmem:[%s7 + $0x10] sm:$0xff]
      %v1849 = vld [vmem:[%s7 + $0x18] sm:$0xff]
      %v1850 = vld [vmem:[#allocation4] sm:$0xff]
      %v1851 = vld [vmem:[#allocation4 + $0x8] sm:$0xff]
      %v1852 = vld [vmem:[#allocation4 + $0x10] sm:$0xff]
      %v1853 = vld [vmem:[#allocation4 + $0x18] sm:$0xff]
      %v1854 = vld [vmem:[#allocation4 + $0x20] sm:$0xff]
      %v1855 = vld [vmem:[#allocation4 + $0x28] sm:$0xff]
      %v1856 = vld [vmem:[#allocation4 + $0x30] sm:$0xff]
      %v1857 = vld [vmem:[#allocation4 + $0x38] sm:$0xff]
      %v1858 = vld [vmem:[#allocation4 + $0x40] sm:$0xff]
      %v1859 = vld [vmem:[#allocation4 + $0x48] sm:$0xff]
      %v1860 = vld [vmem:[#allocation4 + $0x50] sm:$0xff]
      %v1861 = vld [vmem:[#allocation4 + $0x58] sm:$0xff]
      %v1862 = vld [vmem:[#allocation4 + $0x60] sm:$0xff]
      %v1863 = vld [vmem:[#allocation4 + $0x68] sm:$0xff]
      %v1864 = vld [vmem:[#allocation4 + $0x70] sm:$0xff]
      %v1865 = vld [vmem:[#allocation4 + $0x78] sm:$0xff]
      %v1866 = vld [vmem:[#allocation4 + $0x80] sm:$0xff]
      %v1867 = vld [vmem:[#allocation4 + $0x88] sm:$0xff]
      %v1868 = vld [vmem:[#allocation4 + $0x90] sm:$0xff]
      %v1869 = vld [vmem:[#allocation4 + $0x98] sm:$0xff]
      %v1870 = vld [vmem:[#allocation4 + $0xa0] sm:$0xff]
      %v1871 = vld [vmem:[#allocation4 + $0xa8] sm:$0xff]
      %v1872 = vld [vmem:[#allocation4 + $0xb0] sm:$0xff]
      %v1873 = vld [vmem:[#allocation4 + $0xb8] sm:$0xff]
      %v1874 = vld [vmem:[#allocation4 + $0xc0] sm:$0xff]
      %v1875 = vld [vmem:[#allocation4 + $0xc8] sm:$0xff]
      %v1876 = vld [vmem:[#allocation4 + $0xd0] sm:$0xff]
      %v1877 = vld [vmem:[#allocation4 + $0xd8] sm:$0xff]
      %v1878 = vld [vmem:[#allocation4 + $0xe0] sm:$0xff]
      %v1879 = vld [vmem:[#allocation4 + $0xe8] sm:$0xff]
      %v1880 = vld [vmem:[#allocation4 + $0xf0] sm:$0xff]
      %v1881 = vld [vmem:[#allocation4 + $0xf8] sm:$0xff]
      %v1882 = vld [vmem:[#allocation4 + $0x100] sm:$0xff]
      %v1883 = vld [vmem:[#allocation4 + $0x108] sm:$0xff]
      %v1884 = vld [vmem:[#allocation4 + $0x110] sm:$0xff]
      %v1885 = vld [vmem:[#allocation4 + $0x118] sm:$0xff]
      %v1886 = vld [vmem:[#allocation4 + $0x120] sm:$0xff]
      %v1887 = vld [vmem:[#allocation4 + $0x128] sm:$0xff]
      %v1888 = vld [vmem:[#allocation4 + $0x130] sm:$0xff]
      %v1889 = vld [vmem:[#allocation4 + $0x138] sm:$0xff]
      %v1890 = vld [vmem:[#allocation4 + $0x140] sm:$0xff]
      %v1891 = vld [vmem:[#allocation4 + $0x148] sm:$0xff]
      %v1892 = vld [vmem:[#allocation4 + $0x150] sm:$0xff]
      %v1893 = vld [vmem:[#allocation4 + $0x158] sm:$0xff]
      %v1894 = vld [vmem:[#allocation4 + $0x160] sm:$0xff]
      %v1895 = vld [vmem:[#allocation4 + $0x168] sm:$0xff]
      %v1896 = vld [vmem:[#allocation4 + $0x170] sm:$0xff]
      %v1897 = vld [vmem:[#allocation4 + $0x178] sm:$0xff]
      %v1898 = vld [vmem:[#allocation4 + $0x180] sm:$0xff]
      %v1899 = vld [vmem:[#allocation4 + $0x188] sm:$0xff]
      %v1900 = vld [vmem:[#allocation4 + $0x190] sm:$0xff]
      %v1901 = vld [vmem:[#allocation4 + $0x198] sm:$0xff]
      %v1902 = vld [vmem:[#allocation4 + $0x1a0] sm:$0xff]
      %v1903 = vld [vmem:[#allocation4 + $0x1a8] sm:$0xff]
      %v1904 = vld [vmem:[#allocation4 + $0x1b0] sm:$0xff]
      %v1905 = vld [vmem:[#allocation4 + $0x1b8] sm:$0xff]
      %v1906 = vld [vmem:[#allocation4 + $0x1c0] sm:$0xff]
      %v1907 = vld [vmem:[#allocation4 + $0x1c8] sm:$0xff]
      %v1908 = vld [vmem:[#allocation4 + $0x1d0] sm:$0xff]
      %v1909 = vld [vmem:[#allocation4 + $0x1d8] sm:$0xff]
      %v1910 = vld [vmem:[#allocation4 + $0x1e0] sm:$0xff]
      %v1911 = vld [vmem:[#allocation4 + $0x1e8] sm:$0xff]
      %v1912 = vld [vmem:[#allocation4 + $0x1f0] sm:$0xff]
      %v1913 = vld [vmem:[#allocation4 + $0x1f8] sm:$0xff]
      %v1914 = vld [vmem:[#allocation4 + $0x200] sm:$0xff]
      %v1915 = vld [vmem:[#allocation4 + $0x208] sm:$0xff]
      %v1916 = vld [vmem:[#allocation4 + $0x210] sm:$0xff]
      %v1917 = vld [vmem:[#allocation4 + $0x218] sm:$0xff]
      %v1918 = vld [vmem:[#allocation4 + $0x220] sm:$0xff]
      %v1919 = vld [vmem:[#allocation4 + $0x228] sm:$0xff]
      %v1920 = vld [vmem:[#allocation4 + $0x230] sm:$0xff]
      %v1921 = vld [vmem:[#allocation4 + $0x238] sm:$0xff]
      %v1922 = vld [vmem:[#allocation4 + $0x240] sm:$0xff]
      %v1923 = vld [vmem:[#allocation4 + $0x248] sm:$0xff]
      %v1924 = vld [vmem:[#allocation4 + $0x250] sm:$0xff]
      %v1925 = vld [vmem:[#allocation4 + $0x258] sm:$0xff]
      %v1926 = vld [vmem:[#allocation4 + $0x260] sm:$0xff]
      %v1927 = vld [vmem:[#allocation4 + $0x268] sm:$0xff]
      %v1928 = vld [vmem:[#allocation4 + $0x270] sm:$0xff]
      %v1929 = vld [vmem:[#allocation4 + $0x278] sm:$0xff]
      %v1930 = vld [vmem:[#allocation4 + $0x280] sm:$0xff]
      %v1931 = vld [vmem:[%s8] sm:$0xff]
      %v1932 = vld [vmem:[%s8 + $0x8] sm:$0xff]
      %1934 = vset.pattern.permute.xlu0 0
      %1935 = vperm.xlu0 %1934, %v1931
      %v1936 = vpop.permute.xlu0 %1935
      %1939 = vset.pattern.permute.xlu0 0
      %1940 = vperm.xlu0 %1939, %v1932
      %v1941 = vpop.permute.xlu0 %1940
      %vm1943 = vcmask 719872
      %v1945 = vsel %vm1943, %v1847, 0
      %v1948 = vsel %vm1943, %v1849, 0
      %1950 = vmatprep.subr.mxu0 %v1851
      %1951 = vmatpush1.msra.mxu0 %v1850
      %1952 = vmatprep.subr.mxu0 %v1854
      %1953 = vmatpush1.msra.mxu0 %v1853
      %1954 = vmatprep.subr.mxu0 %v1857
      %1955 = vmatpush1.msra.mxu0 %v1856
      %1956 = vmatprep.subr.mxu0 %v1860
      %1957 = vmatpush1.msra.mxu0 %v1859
      %1958 = vmatprep.subr.mxu0 %v1863
      %1959 = vmatpush1.msra.mxu0 %v1862
      %1960 = vmatprep.subr.mxu0 %v1866
      %1961 = vmatpush1.msra.mxu0 %v1865
      %1962 = vmatprep.subr.mxu0 %v1869
      %1963 = vmatpush1.msra.mxu0 %v1868
      %1964 = vmatprep.subr.mxu0 %v1872
      %1965 = vmatpush1.msra.mxu0 %v1871
      %1966 = vmatprep.subr.mxu0 %v1875
      %1967 = vmatpush1.msra.mxu0 %v1874
      %1968 = vmatprep.subr.mxu0 %v1878
      %1969 = vmatpush1.msra.mxu0 %v1877
      %1970 = vmatprep.subr.mxu0 %v1881
      %1971 = vmatpush1.msra.mxu0 %v1880
      %1972 = vmatprep.subr.mxu0 %v1884
      %1973 = vmatpush1.msra.mxu0 %v1883
      %1974 = vmatprep.subr.mxu0 %v1887
      %1975 = vmatpush1.msra.mxu0 %v1886
      %1976 = vmatprep.subr.mxu0 %v1890
      %1977 = vmatpush1.msra.mxu0 %v1889
      %1978 = vmatprep.subr.mxu0 %v1893
      %1979 = vmatpush1.msra.mxu0 %v1892
      %1980 = vmatprep.subr.mxu0 %v1896
      %1981 = vmatpush1.msra.mxu0 %v1895
      %1982 = vmatprep.subr.mxu0 %v1899
      %1983 = vmatpush1.msra.mxu0 %v1898
      %1984 = vmatprep.subr.mxu0 %v1902
      %1985 = vmatpush1.msra.mxu0 %v1901
      %1986 = vmatprep.subr.mxu0 %v1905
      %1987 = vmatpush1.msra.mxu0 %v1904
      %1988 = vmatprep.subr.mxu0 %v1908
      %1989 = vmatpush1.msra.mxu0 %v1907
      %1990 = vmatprep.subr.mxu0 %v1911
      %1991 = vmatpush1.msra.mxu0 %v1910
      %1992 = vmatprep.subr.mxu0 %v1914
      %1993 = vmatpush1.msra.mxu0 %v1913
      %1994 = vmatprep.subr.mxu0 %v1917
      %1995 = vmatpush1.msra.mxu0 %v1916
      %1996 = vmatprep.subr.mxu0 %v1920
      %1997 = vmatpush1.msra.mxu0 %v1919
      %1998 = vmatprep.subr.mxu0 %v1923
      %1999 = vmatpush1.msra.mxu0 %v1922
      %2000 = vmatprep.subr.mxu0 %v1926
      %2001 = vmatpush1.msra.mxu0 %v1925
      %2002 = vmatprep.subr.mxu0 %v1929
      %2003 = vmatpush1.msra.mxu0 %v1928
      %2004 = vmatprep.subr.mxu0 0.0
      %2005 = vmatpush1.msra.mxu0 0.0
      %2006 = vmatprep.subr.mxu0 0.0
      %2007 = vmatpush1.msra.mxu0 0.0
      %2008 = vmatprep.subr.mxu0 0.0
      %2009 = vmatpush1.msra.mxu0 0.0
      %2010 = vmatprep.subr.mxu0 0.0
      %2011 = vmatpush1.msra.mxu0 0.0
      %2012 = vmatprep.subr.mxu0 0.0
      %2013 = vmatpush1.msra.mxu0 0.0
      %2014 = vmatprep.mubr.f32.mxu0 %v1945
      %2015 = vmatmul.mubr.f32.gmra.mrb[0].mxu0 %v1846
      %v2016 = vpop.f32.mrb[0].mxu0
      %v2017 = vadd.f32 %v1936, %v2016
      %v2018 = vpop.f32.mrb[0].mxu0
      %v2019 = vadd.f32 %v1936, %v2018
      %2020 = vmatprep.mubr.f32.mxu0 %v1948
      %2021 = vmatmul.mubr.f32.gmra.mrb[0].mxu0 %v1848
      %v2022 = vpop.f32.mrb[0].mxu0
      %v2023 = vadd.f32 %v1941, %v2022
      %v2024 = vpop.f32.mrb[0].mxu0
      %v2025 = vadd.f32 %v1941, %v2024
      %2026 = vdwg.mxu0
      %2027 = vmatprep.subr.mxu0 0.0
      %2028 = vmatpush1.msra.mxu0 %v1852
      %2029 = vmatprep.subr.mxu0 0.0
      %2030 = vmatpush1.msra.mxu0 %v1855
      %2031 = vmatprep.subr.mxu0 0.0
      %2032 = vmatpush1.msra.mxu0 %v1858
      %2033 = vmatprep.subr.mxu0 0.0
      %2034 = vmatpush1.msra.mxu0 %v1861
      %2035 = vmatprep.subr.mxu0 0.0
      %2036 = vmatpush1.msra.mxu0 %v1864
      %2037 = vmatprep.subr.mxu0 0.0
      %2038 = vmatpush1.msra.mxu0 %v1867
      %2039 = vmatprep.subr.mxu0 0.0
      %2040 = vmatpush1.msra.mxu0 %v1870
      %2041 = vmatprep.subr.mxu0 0.0
      %2042 = vmatpush1.msra.mxu0 %v1873
      %2043 = vmatprep.subr.mxu0 0.0
      %2044 = vmatpush1.msra.mxu0 %v1876
      %2045 = vmatprep.subr.mxu0 0.0
      %2046 = vmatpush1.msra.mxu0 %v1879
      %2047 = vmatprep.subr.mxu0 0.0
      %2048 = vmatpush1.msra.mxu0 %v1882
      %2049 = vmatprep.subr.mxu0 0.0
      %2050 = vmatpush1.msra.mxu0 %v1885
      %2051 = vmatprep.subr.mxu0 0.0
      %2052 = vmatpush1.msra.mxu0 %v1888
      %2053 = vmatprep.subr.mxu0 0.0
      %2054 = vmatpush1.msra.mxu0 %v1891
      %2055 = vmatprep.subr.mxu0 0.0
      %2056 = vmatpush1.msra.mxu0 %v1894
      %2057 = vmatprep.subr.mxu0 0.0
      %2058 = vmatpush1.msra.mxu0 %v1897
      %2059 = vmatprep.subr.mxu0 0.0
      %2060 = vmatpush1.msra.mxu0 %v1900
      %2061 = vmatprep.subr.mxu0 0.0
      %2062 = vmatpush1.msra.mxu0 %v1903
      %2063 = vmatprep.subr.mxu0 0.0
      %2064 = vmatpush1.msra.mxu0 %v1906
      %2065 = vmatprep.subr.mxu0 0.0
      %2066 = vmatpush1.msra.mxu0 %v1909
      %2067 = vmatprep.subr.mxu0 0.0
      %2068 = vmatpush1.msra.mxu0 %v1912
      %2069 = vmatprep.subr.mxu0 0.0
      %2070 = vmatpush1.msra.mxu0 %v1915
      %2071 = vmatprep.subr.mxu0 0.0
      %2072 = vmatpush1.msra.mxu0 %v1918
      %2073 = vmatprep.subr.mxu0 0.0
      %2074 = vmatpush1.msra.mxu0 %v1921
      %2075 = vmatprep.subr.mxu0 0.0
      %2076 = vmatpush1.msra.mxu0 %v1924
      %2077 = vmatprep.subr.mxu0 0.0
      %2078 = vmatpush1.msra.mxu0 %v1927
      %2079 = vmatprep.subr.mxu0 0.0
      %2080 = vmatpush1.msra.mxu0 %v1930
      %2081 = vmatprep.subr.mxu0 0.0
      %2082 = vmatpush1.msra.mxu0 0.0
      %2083 = vmatprep.subr.mxu0 0.0
      %2084 = vmatpush1.msra.mxu0 0.0
      %2085 = vmatprep.subr.mxu0 0.0
      %2086 = vmatpush1.msra.mxu0 0.0
      %2087 = vmatprep.subr.mxu0 0.0
      %2088 = vmatpush1.msra.mxu0 0.0
      %2089 = vmatprep.subr.mxu0 0.0
      %2090 = vmatpush1.msra.mxu0 0.0
      %2091 = vmatprep.mubr.f32.mxu0 %v1945
      %2092 = vmatmul.mubr.f32.gmra.mrb[0].mxu0 %v1846
      %v2093 = vpop.f32.mrb[0].mxu0
      %v2094 = vadd.f32 %v1936, %v2093
      %v2095 = vpop.f32.mrb[0].mxu0
      %2096 = vmatprep.mubr.f32.mxu0 %v1948
      %2097 = vmatmul.mubr.f32.gmra.mrb[0].mxu0 %v1848
      %v2098 = vpop.f32.mrb[0].mxu0
      %v2099 = vadd.f32 %v1941, %v2098
      %v2100 = vpop.f32.mrb[0].mxu0
      %2101 = vdwg.mxu0
      %v2102 = vld [vmem:[%s9] sm:$0xff]
      %v2103 = vld [vmem:[%s9 + $0x8] sm:$0xff]
      %v2104 = vld [vmem:[%s10] sm:$0xff]
      %v2105 = vld [vmem:[%s10 + $0x8] sm:$0xff]
      %v2106 = vmul.f32 %v2017, %v832
      %v2107 = vmul.f32 %v2019, %v833
      %v2108 = vmul.f32 %v2094, %v831
      %v2109 = vmul.f32 %v2023, %v832
      %v2110 = vmul.f32 %v2025, %v833
      %v2111 = vmul.f32 %v2099, %v831
      %2112 = vmatprep.subr.mxu0 %v2107
      %2113 = vmatpush1.msra.mxu0 %v2106
      %2114 = vmatprep.subr.mxu0 %v2110
      %2115 = vmatpush1.msra.mxu0 %v2109
      %2116 = vmatprep.subr.mxu0 0.0
      %2117 = vmatpush1.msra.mxu0 0.0
      %2118 = vmatprep.subr.mxu0 0.0
      %2119 = vmatpush1.msra.mxu0 0.0
      %2120 = vmatprep.subr.mxu0 0.0
      %2121 = vmatpush1.msra.mxu0 0.0
      %2122 = vmatprep.subr.mxu0 0.0
      %2123 = vmatpush1.msra.mxu0 0.0
      %2124 = vmatprep.subr.mxu0 0.0
      %2125 = vmatpush1.msra.mxu0 0.0
      %2126 = vmatprep.subr.mxu0 0.0
      %2127 = vmatpush1.msra.mxu0 0.0
      %2128 = vmatprep.subr.mxu0 0.0
      %2129 = vmatpush1.msra.mxu0 0.0
      %2130 = vmatprep.subr.mxu0 0.0
      %2131 = vmatpush1.msra.mxu0 0.0
      %2132 = vmatprep.subr.mxu0 0.0
      %2133 = vmatpush1.msra.mxu0 0.0
      %2134 = vmatprep.subr.mxu0 0.0
      %2135 = vmatpush1.msra.mxu0 0.0
      %2136 = vmatprep.subr.mxu0 0.0
      %2137 = vmatpush1.msra.mxu0 0.0
      %2138 = vmatprep.subr.mxu0 0.0
      %2139 = vmatpush1.msra.mxu0 0.0
      %2140 = vmatprep.subr.mxu0 0.0
      %2141 = vmatpush1.msra.mxu0 0.0
      %2142 = vmatprep.subr.mxu0 0.0
      %2143 = vmatpush1.msra.mxu0 0.0
      %2144 = vmatprep.subr.mxu0 0.0
      %2145 = vmatpush1.msra.mxu0 0.0
      %2146 = vmatprep.subr.mxu0 0.0
      %2147 = vmatpush1.msra.mxu0 0.0
      %2148 = vmatprep.subr.mxu0 0.0
      %2149 = vmatpush1.msra.mxu0 0.0
      %2150 = vmatprep.subr.mxu0 0.0
      %2151 = vmatpush1.msra.mxu0 0.0
      %2152 = vmatprep.subr.mxu0 0.0
      %2153 = vmatpush1.msra.mxu0 0.0
      %2154 = vmatprep.subr.mxu0 0.0
      %2155 = vmatpush1.msra.mxu0 0.0
      %2156 = vmatprep.subr.mxu0 0.0
      %2157 = vmatpush1.msra.mxu0 0.0
      %2158 = vmatprep.subr.mxu0 0.0
      %2159 = vmatpush1.msra.mxu0 0.0
      %2160 = vmatprep.subr.mxu0 0.0
      %2161 = vmatpush1.msra.mxu0 0.0
      %2162 = vmatprep.subr.mxu0 0.0
      %2163 = vmatpush1.msra.mxu0 0.0
      %2164 = vmatprep.subr.mxu0 0.0
      %2165 = vmatpush1.msra.mxu0 0.0
      %2166 = vmatprep.subr.mxu0 0.0
      %2167 = vmatpush1.msra.mxu0 0.0
      %2168 = vmatprep.subr.mxu0 0.0
      %2169 = vmatpush1.msra.mxu0 0.0
      %2170 = vmatprep.subr.mxu0 0.0
      %2171 = vmatpush1.msra.mxu0 0.0
      %2172 = vmatprep.subr.mxu0 0.0
      %2173 = vmatpush1.msra.mxu0 0.0
      %2174 = vmatprep.subr.mxu0 0.0
      %2175 = vmatpush1.msra.mxu0 0.0
      %2176 = vmatprep.mubr.f32.mxu0 0.0
      %2177 = vmatmul.mubr.f32.gmra.mrb[0].mxu0 %v845
      %v2178 = vpop.f32.mrb[0].mxu0
      %v2179 = vadd.f32 0.0, %v2178
      %v2180 = vpop.f32.mrb[0].mxu0
      %v2181 = vadd.f32 0.0, %v2180
      %2182 = vmatprep.mubr.f32.mxu0 0.0
      %2183 = vmatmul.mubr.f32.gmra.mrb[0].mxu0 %v848
      %v2184 = vpop.f32.mrb[0].mxu0
      %v2185 = vadd.f32 0.0, %v2184
      %v2186 = vpop.f32.mrb[0].mxu0
      %v2187 = vadd.f32 0.0, %v2186
      %2188 = vdwg.mxu0
      %2189 = vmatprep.subr.mxu0 0.0
      %2190 = vmatpush1.msra.mxu0 %v2108
      %2191 = vmatprep.subr.mxu0 0.0
      %2192 = vmatpush1.msra.mxu0 %v2111
      %2193 = vmatprep.subr.mxu0 0.0
      %2194 = vmatpush1.msra.mxu0 0.0
      %2195 = vmatprep.subr.mxu0 0.0
      %2196 = vmatpush1.msra.mxu0 0.0
      %2197 = vmatprep.subr.mxu0 0.0
      %2198 = vmatpush1.msra.mxu0 0.0
      %2199 = vmatprep.subr.mxu0 0.0
      %2200 = vmatpush1.msra.mxu0 0.0
      %2201 = vmatprep.subr.mxu0 0.0
      %2202 = vmatpush1.msra.mxu0 0.0
      %2203 = vmatprep.subr.mxu0 0.0
      %2204 = vmatpush1.msra.mxu0 0.0
      %2205 = vmatprep.subr.mxu0 0.0
      %2206 = vmatpush1.msra.mxu0 0.0
      %2207 = vmatprep.subr.mxu0 0.0
      %2208 = vmatpush1.msra.mxu0 0.0
      %2209 = vmatprep.subr.mxu0 0.0
      %2210 = vmatpush1.msra.mxu0 0.0
      %2211 = vmatprep.subr.mxu0 0.0
      %2212 = vmatpush1.msra.mxu0 0.0
      %2213 = vmatprep.subr.mxu0 0.0
      %2214 = vmatpush1.msra.mxu0 0.0
      %2215 = vmatprep.subr.mxu0 0.0
      %2216 = vmatpush1.msra.mxu0 0.0
      %2217 = vmatprep.subr.mxu0 0.0
      %2218 = vmatpush1.msra.mxu0 0.0
      %2219 = vmatprep.subr.mxu0 0.0
      %2220 = vmatpush1.msra.mxu0 0.0
      %2221 = vmatprep.subr.mxu0 0.0
      %2222 = vmatpush1.msra.mxu0 0.0
      %2223 = vmatprep.subr.mxu0 0.0
      %2224 = vmatpush1.msra.mxu0 0.0
      %2225 = vmatprep.subr.mxu0 0.0
      %2226 = vmatpush1.msra.mxu0 0.0
      %2227 = vmatprep.subr.mxu0 0.0
      %2228 = vmatpush1.msra.mxu0 0.0
      %2229 = vmatprep.subr.mxu0 0.0
      %2230 = vmatpush1.msra.mxu0 0.0
      %2231 = vmatprep.subr.mxu0 0.0
      %2232 = vmatpush1.msra.mxu0 0.0
      %2233 = vmatprep.subr.mxu0 0.0
      %2234 = vmatpush1.msra.mxu0 0.0
      %2235 = vmatprep.subr.mxu0 0.0
      %2236 = vmatpush1.msra.mxu0 0.0
      %2237 = vmatprep.subr.mxu0 0.0
      %2238 = vmatpush1.msra.mxu0 0.0
      %2239 = vmatprep.subr.mxu0 0.0
      %2240 = vmatpush1.msra.mxu0 0.0
      %2241 = vmatprep.subr.mxu0 0.0
      %2242 = vmatpush1.msra.mxu0 0.0
      %2243 = vmatprep.subr.mxu0 0.0
      %2244 = vmatpush1.msra.mxu0 0.0
      %2245 = vmatprep.subr.mxu0 0.0
      %2246 = vmatpush1.msra.mxu0 0.0
      %2247 = vmatprep.subr.mxu0 0.0
      %2248 = vmatpush1.msra.mxu0 0.0
      %2249 = vmatprep.subr.mxu0 0.0
      %2250 = vmatpush1.msra.mxu0 0.0
      %2251 = vmatprep.subr.mxu0 0.0
      %2252 = vmatpush1.msra.mxu0 0.0
      %2253 = vmatprep.mubr.f32.mxu0 0.0
      %2254 = vmatmul.mubr.f32.gmra.mrb[0].mxu0 %v845
      %v2255 = vpop.f32.mrb[0].mxu0
      %v2256 = vadd.f32 0.0, %v2255
      %v2257 = vpop.f32.mrb[0].mxu0
      %2258 = vmatprep.mubr.f32.mxu0 0.0
      %2259 = vmatmul.mubr.f32.gmra.mrb[0].mxu0 %v848
      %v2260 = vpop.f32.mrb[0].mxu0
      %v2261 = vadd.f32 0.0, %v2260
      %v2262 = vpop.f32.mrb[0].mxu0
      %2263 = vdwg.mxu0
      %v2264 = vadd.f32 %v2179, %v2181
      %v2265 = vsel %vm439, %v2256, 0.0
      %v2266 = vadd.f32 %v2264, %v2265
      %2267 = vadd.xlane.f32.xlu0 %v2266
      %v2268 = vpop.xlane.xlu0 %2267
      %v2269 = vadd.f32 %v2185, %v2187
      %v2270 = vsel %vm439, %v2261, 0.0
      %v2271 = vadd.f32 %v2269, %v2270
      %2272 = vadd.xlane.f32.xlu0 %v2271
      %v2273 = vpop.xlane.xlu0 %2272
      %v2274 = vmul.f32 %v2268, 0.001953125
      %v2275 = vmul.f32 %v2273, 0.001953125
      %v2276 = vsub.f32 %v2017, %v2274
      %v2277 = vsub.f32 %v2019, %v2274
      %v2278 = vsub.f32 %v2094, %v2274
      %v2279 = vsub.f32 %v2023, %v2275
      %v2280 = vsub.f32 %v2025, %v2275
      %v2281 = vsub.f32 %v2099, %v2275
      %v2282 = vmul.f32 %v2276, %v832
      %v2283 = vmul.f32 %v2277, %v833
      %v2284 = vmul.f32 %v2278, %v831
      %v2285 = vmul.f32 %v2279, %v832
      %v2286 = vmul.f32 %v2280, %v833
      %v2287 = vmul.f32 %v2281, %v831
      %v2288 = vmul.f32 %v2282, %v2282
      %v2289 = vmul.f32 %v2283, %v2283
      %v2290 = vmul.f32 %v2284, %v2284
      %v2291 = vmul.f32 %v2285, %v2285
      %v2292 = vmul.f32 %v2286, %v2286
      %v2293 = vmul.f32 %v2287, %v2287
      %2294 = vmatprep.subr.mxu0 %v2289
      %2295 = vmatpush1.msra.mxu0 %v2288
      %2296 = vmatprep.subr.mxu0 %v2292
      %2297 = vmatpush1.msra.mxu0 %v2291
      %2298 = vmatprep.subr.mxu0 0.0
      %2299 = vmatpush1.msra.mxu0 0.0
      %2300 = vmatprep.subr.mxu0 0.0
      %2301 = vmatpush1.msra.mxu0 0.0
      %2302 = vmatprep.subr.mxu0 0.0
      %2303 = vmatpush1.msra.mxu0 0.0
      %2304 = vmatprep.subr.mxu0 0.0
      %2305 = vmatpush1.msra.mxu0 0.0
      %2306 = vmatprep.subr.mxu0 0.0
      %2307 = vmatpush1.msra.mxu0 0.0
      %2308 = vmatprep.subr.mxu0 0.0
      %2309 = vmatpush1.msra.mxu0 0.0
      %2310 = vmatprep.subr.mxu0 0.0
      %2311 = vmatpush1.msra.mxu0 0.0
      %2312 = vmatprep.subr.mxu0 0.0
      %2313 = vmatpush1.msra.mxu0 0.0
      %2314 = vmatprep.subr.mxu0 0.0
      %2315 = vmatpush1.msra.mxu0 0.0
      %2316 = vmatprep.subr.mxu0 0.0
      %2317 = vmatpush1.msra.mxu0 0.0
      %2318 = vmatprep.subr.mxu0 0.0
      %2319 = vmatpush1.msra.mxu0 0.0
      %2320 = vmatprep.subr.mxu0 0.0
      %2321 = vmatpush1.msra.mxu0 0.0
      %2322 = vmatprep.subr.mxu0 0.0
      %2323 = vmatpush1.msra.mxu0 0.0
      %2324 = vmatprep.subr.mxu0 0.0
      %2325 = vmatpush1.msra.mxu0 0.0
      %2326 = vmatprep.subr.mxu0 0.0
      %2327 = vmatpush1.msra.mxu0 0.0
      %2328 = vmatprep.subr.mxu0 0.0
      %2329 = vmatpush1.msra.mxu0 0.0
      %2330 = vmatprep.subr.mxu0 0.0
      %2331 = vmatpush1.msra.mxu0 0.0
      %2332 = vmatprep.subr.mxu0 0.0
      %2333 = vmatpush1.msra.mxu0 0.0
      %2334 = vmatprep.subr.mxu0 0.0
      %2335 = vmatpush1.msra.mxu0 0.0
      %2336 = vmatprep.subr.mxu0 0.0
      %2337 = vmatpush1.msra.mxu0 0.0
      %2338 = vmatprep.subr.mxu0 0.0
      %2339 = vmatpush1.msra.mxu0 0.0
      %2340 = vmatprep.subr.mxu0 0.0
      %2341 = vmatpush1.msra.mxu0 0.0
      %2342 = vmatprep.subr.mxu0 0.0
      %2343 = vmatpush1.msra.mxu0 0.0
      %2344 = vmatprep.subr.mxu0 0.0
      %2345 = vmatpush1.msra.mxu0 0.0
      %2346 = vmatprep.subr.mxu0 0.0
      %2347 = vmatpush1.msra.mxu0 0.0
      %2348 = vmatprep.subr.mxu0 0.0
      %2349 = vmatpush1.msra.mxu0 0.0
      %2350 = vmatprep.subr.mxu0 0.0
      %2351 = vmatpush1.msra.mxu0 0.0
      %2352 = vmatprep.subr.mxu0 0.0
      %2353 = vmatpush1.msra.mxu0 0.0
      %2354 = vmatprep.subr.mxu0 0.0
      %2355 = vmatpush1.msra.mxu0 0.0
      %2356 = vmatprep.subr.mxu0 0.0
      %2357 = vmatpush1.msra.mxu0 0.0
      %2358 = vmatprep.mubr.f32.mxu0 0.0
      %2359 = vmatmul.mubr.f32.gmra.mrb[0].mxu0 %v845
      %v2360 = vpop.f32.mrb[0].mxu0
      %v2361 = vadd.f32 0.0, %v2360
      %v2362 = vpop.f32.mrb[0].mxu0
      %v2363 = vadd.f32 0.0, %v2362
      %2364 = vmatprep.mubr.f32.mxu0 0.0
      %2365 = vmatmul.mubr.f32.gmra.mrb[0].mxu0 %v848
      %v2366 = vpop.f32.mrb[0].mxu0
      %v2367 = vadd.f32 0.0, %v2366
      %v2368 = vpop.f32.mrb[0].mxu0
      %v2369 = vadd.f32 0.0, %v2368
      %2370 = vdwg.mxu0
      %2371 = vmatprep.subr.mxu0 0.0
      %2372 = vmatpush1.msra.mxu0 %v2290
      %2373 = vmatprep.subr.mxu0 0.0
      %2374 = vmatpush1.msra.mxu0 %v2293
      %2375 = vmatprep.subr.mxu0 0.0
      %2376 = vmatpush1.msra.mxu0 0.0
      %2377 = vmatprep.subr.mxu0 0.0
      %2378 = vmatpush1.msra.mxu0 0.0
      %2379 = vmatprep.subr.mxu0 0.0
      %2380 = vmatpush1.msra.mxu0 0.0
      %2381 = vmatprep.subr.mxu0 0.0
      %2382 = vmatpush1.msra.mxu0 0.0
      %2383 = vmatprep.subr.mxu0 0.0
      %2384 = vmatpush1.msra.mxu0 0.0
      %2385 = vmatprep.subr.mxu0 0.0
      %2386 = vmatpush1.msra.mxu0 0.0
      %2387 = vmatprep.subr.mxu0 0.0
      %2388 = vmatpush1.msra.mxu0 0.0
      %2389 = vmatprep.subr.mxu0 0.0
      %2390 = vmatpush1.msra.mxu0 0.0
      %2391 = vmatprep.subr.mxu0 0.0
      %2392 = vmatpush1.msra.mxu0 0.0
      %2393 = vmatprep.subr.mxu0 0.0
      %2394 = vmatpush1.msra.mxu0 0.0
      %2395 = vmatprep.subr.mxu0 0.0
      %2396 = vmatpush1.msra.mxu0 0.0
      %2397 = vmatprep.subr.mxu0 0.0
      %2398 = vmatpush1.msra.mxu0 0.0
      %2399 = vmatprep.subr.mxu0 0.0
      %2400 = vmatpush1.msra.mxu0 0.0
      %2401 = vmatprep.subr.mxu0 0.0
      %2402 = vmatpush1.msra.mxu0 0.0
      %2403 = vmatprep.subr.mxu0 0.0
      %2404 = vmatpush1.msra.mxu0 0.0
      %2405 = vmatprep.subr.mxu0 0.0
      %2406 = vmatpush1.msra.mxu0 0.0
      %2407 = vmatprep.subr.mxu0 0.0
      %2408 = vmatpush1.msra.mxu0 0.0
      %2409 = vmatprep.subr.mxu0 0.0
      %2410 = vmatpush1.msra.mxu0 0.0
      %2411 = vmatprep.subr.mxu0 0.0
      %2412 = vmatpush1.msra.mxu0 0.0
      %2413 = vmatprep.subr.mxu0 0.0
      %2414 = vmatpush1.msra.mxu0 0.0
      %2415 = vmatprep.subr.mxu0 0.0
      %2416 = vmatpush1.msra.mxu0 0.0
      %2417 = vmatprep.subr.mxu0 0.0
      %2418 = vmatpush1.msra.mxu0 0.0
      %2419 = vmatprep.subr.mxu0 0.0
      %2420 = vmatpush1.msra.mxu0 0.0
      %2421 = vmatprep.subr.mxu0 0.0
      %2422 = vmatpush1.msra.mxu0 0.0
      %2423 = vmatprep.subr.mxu0 0.0
      %2424 = vmatpush1.msra.mxu0 0.0
      %2425 = vmatprep.subr.mxu0 0.0
      %2426 = vmatpush1.msra.mxu0 0.0
      %2427 = vmatprep.subr.mxu0 0.0
      %2428 = vmatpush1.msra.mxu0 0.0
      %2429 = vmatprep.subr.mxu0 0.0
      %2430 = vmatpush1.msra.mxu0 0.0
      %2431 = vmatprep.subr.mxu0 0.0
      %2432 = vmatpush1.msra.mxu0 0.0
      %2433 = vmatprep.subr.mxu0 0.0
      %2434 = vmatpush1.msra.mxu0 0.0
      %2435 = vmatprep.mubr.f32.mxu0 0.0
      %2436 = vmatmul.mubr.f32.gmra.mrb[0].mxu0 %v845
      %v2437 = vpop.f32.mrb[0].mxu0
      %v2438 = vadd.f32 0.0, %v2437
      %v2439 = vpop.f32.mrb[0].mxu0
      %2440 = vmatprep.mubr.f32.mxu0 0.0
      %2441 = vmatmul.mubr.f32.gmra.mrb[0].mxu0 %v848
      %v2442 = vpop.f32.mrb[0].mxu0
      %v2443 = vadd.f32 0.0, %v2442
      %v2444 = vpop.f32.mrb[0].mxu0
      %2445 = vdwg.mxu0
      %v2446 = vadd.f32 %v2361, %v2363
      %v2447 = vsel %vm439, %v2438, 0.0
      %v2448 = vadd.f32 %v2446, %v2447
      %2449 = vadd.xlane.f32.xlu0 %v2448
      %v2450 = vpop.xlane.xlu0 %2449
      %v2451 = vadd.f32 %v2367, %v2369
      %v2452 = vsel %vm439, %v2443, 0.0
      %v2453 = vadd.f32 %v2451, %v2452
      %2454 = vadd.xlane.f32.xlu0 %v2453
      %v2455 = vpop.xlane.xlu0 %2454
      %v2456 = vmul.f32 %v2450, 0.001953125
      %v2457 = vmul.f32 %v2455, 0.001953125
      %v2458 = vadd.f32 %v2456, 1e-05
      %v2459 = vadd.f32 %v2457, 1e-05
      %v2460 = vrsqrt.pop %v2458
      %v2461 = vrsqrt.pop %v2459
      %v2462 = vmul.f32 %v2276, %v2460
      %v2463 = vmul.f32 %v2277, %v2460
      %v2464 = vmul.f32 %v2278, %v2460
      %v2465 = vmul.f32 %v2279, %v2461
      %v2466 = vmul.f32 %v2280, %v2461
      %v2467 = vmul.f32 %v2281, %v2461
      %2469 = vset.pattern.permute.xlu0 0
      %2470 = vperm.xlu0 %2469, %v2102
      %v2471 = vpop.permute.xlu0 %2470
      %2474 = vset.pattern.permute.xlu0 0
      %2475 = vperm.xlu0 %2474, %v2103
      %v2476 = vpop.permute.xlu0 %2475
      %v2478 = vmul.f32 %v2462, %v2471
      %v2479 = vmul.f32 %v2463, %v2471
      %v2480 = vmul.f32 %v2464, %v2471
      %v2481 = vmul.f32 %v2465, %v2476
      %v2482 = vmul.f32 %v2466, %v2476
      %v2483 = vmul.f32 %v2467, %v2476
      %2485 = vset.pattern.permute.xlu0 0
      %2486 = vperm.xlu0 %2485, %v2104
      %v2487 = vpop.permute.xlu0 %2486
      %2490 = vset.pattern.permute.xlu0 0
      %2491 = vperm.xlu0 %2490, %v2105
      %v2492 = vpop.permute.xlu0 %2491
      %v2494 = vadd.f32 %v2478, %v2487
      %v2495 = vadd.f32 %v2479, %v2487
      %v2496 = vadd.f32 %v2480, %v2487
      %v2497 = vadd.f32 %v2481, %v2492
      %v2498 = vadd.f32 %v2482, %v2492
      %v2499 = vadd.f32 %v2483, %v2492
      %v2500 = vxor.u32 %v2494, 2147483648
      %v2501 = vxor.u32 %v2495, 2147483648
      %v2502 = vxor.u32 %v2496, 2147483648
      %v2503 = vxor.u32 %v2497, 2147483648
      %v2504 = vxor.u32 %v2498, 2147483648
      %v2505 = vxor.u32 %v2499, 2147483648
      %v2506 = vmul.f32 %v2500, 1.442695
      %v2507 = vpow.pop %v2506
      %v2508 = vmul.f32 %v2501, 1.442695
      %v2509 = vpow.pop %v2508
      %v2510 = vmul.f32 %v2502, 1.442695
      %v2511 = vpow.pop %v2510
      %v2512 = vmul.f32 %v2503, 1.442695
      %v2513 = vpow.pop %v2512
      %v2514 = vmul.f32 %v2504, 1.442695
      %v2515 = vpow.pop %v2514
      %v2516 = vmul.f32 %v2505, 1.442695
      %v2517 = vpow.pop %v2516
      %v2518 = vadd.f32 %v2507, 1.0
      %v2519 = vadd.f32 %v2509, 1.0
      %v2520 = vadd.f32 %v2511, 1.0
      %v2521 = vadd.f32 %v2513, 1.0
      %v2522 = vadd.f32 %v2515, 1.0
      %v2523 = vadd.f32 %v2517, 1.0
      %v2524 = vrcp.pop %v2518
      %v2525 = vmul.f32 1.0, %v2524
      %v2526 = vrcp.pop %v2519
      %v2527 = vmul.f32 1.0, %v2526
      %v2528 = vrcp.pop %v2520
      %v2529 = vmul.f32 1.0, %v2528
      %v2530 = vrcp.pop %v2521
      %v2531 = vmul.f32 1.0, %v2530
      %v2532 = vrcp.pop %v2522
      %v2533 = vmul.f32 1.0, %v2532
      %v2534 = vrcp.pop %v2523
      %v2535 = vmul.f32 1.0, %v2534
      %v2536 = vmul.f32 %v2494, %v2525
      %v2537 = vmul.f32 %v2495, %v2527
      %v2538 = vmul.f32 %v2496, %v2529
      %v2539 = vmul.f32 %v2497, %v2531
      %v2540 = vmul.f32 %v2498, %v2533
      %v2541 = vmul.f32 %v2499, %v2535
      %2542 = vst [vmem:[%s430] sm:$0xff] %v2536
      %2543 = vst [vmem:[%s430 + $0x8] sm:$0xff] %v2537
      %2544 = vst.msk [vmem:[%s430 + $0x10] sm:$0xff] %vm439, %v2538
      %2545 = vst [vmem:[%s430 + $0x18] sm:$0xff] %v2539
      %2546 = vst [vmem:[%s430 + $0x20] sm:$0xff] %v2540
      %2547 = vst.msk [vmem:[%s430 + $0x28] sm:$0xff] %vm439, %v2541
      %p2548 = scmp.lt.s32.totalorder %s23, 1
      %s2549 = scalar_select %p2548, %s23, 1
      %s2550 = smul.addr %s2549, 6
      %s2551 = smul.addr %s2550, 8
      %s2552 = scalar_lea.vmem %s12, %s2551
      // Predicated region
      $region69: #{conditioned_double_conv.1} parent=67 // pred_check
        %p2553 = pneg %p303
      $region70: #{conditioned_double_conv.1} parent=67 // pred_check_branch
        %2555 = sbr.rel (%p2553) target = $region72
      $region71: #{conditioned_double_conv.1} parent=67 // pred_region
        _
      $region72: #{conditioned_double_conv.1} parent=67 // pred_fallthru
        _
    $region68: #{conditioned_double_conv.1} parent=5 // pred_fallthru
      _
    %p2556 = scmp.le.s32.totalorder 2, %s18
    // Predicated region
    $region73: #{conditioned_double_conv.1} parent=5 // pred_check
      %p2557 = pneg %p2556
    $region74: #{conditioned_double_conv.1} parent=5 // pred_check_branch
      %2559 = sbr.rel (%p2557) target = $region76
    $region75: #{conditioned_double_conv.1} parent=5 // pred_region
      %s2560 = ssub.s32 %s18, 2
      // Predicated region
      $region77: #{conditioned_double_conv.1} parent=75 // pred_check
        %p2561 = pneg %p309
      $region78: #{conditioned_double_conv.1} parent=75 // pred_check_branch
        %2563 = sbr.rel (%p2561) target = $region80
      $region79: #{conditioned_double_conv.1} parent=75 // pred_region
        %p2564 = scmp.lt.s32.totalorder %s24, 1
        %s2565 = scalar_select %p2564, %s24, 1
        %s2566 = smul.addr %s2565, 6
        %s2567 = smul.addr %s2566, 8
        %s2568 = scalar_lea.vmem %s12, %s2567
      $region80: #{conditioned_double_conv.1} parent=75 // pred_fallthru
        _
    $region76: #{conditioned_double_conv.1} parent=5 // pred_fallthru
      _
  $region6: #{conditioned_double_conv.1} parent=0 // loop_footer
    %s22 = sadd.s32 1, %s18
  $region7: #{conditioned_double_conv.1} parent=0 // loop_footer_branch
    %17 = sbr.rel target = $region3
  $region8: #{conditioned_double_conv.1} parent=0 // loop_exit
    _

</llo_original>
